<compile_context>
chip_gen: v7x
topology: tpu7x:2x2x1
jax: 0.10.0
libtpu: 0.0.40
codegen_flags: <defaults>
</compile_context>

<pallas_src>
import functools

import jax
import jax.numpy as jnp
from jax.experimental import pallas as pl
from jax.experimental.pallas import tpu as pltpu


def _lstm_chunk_kernel(x_ref, w_in_ref, b_in_ref, w_ih_ref, w_hh_ref,
                       b_gate_ref, h_hist_ref, gx_ref, h_scr, c_scr):
    """One (agent_block, time_chunk) grid step.

    Gate columns are pre-permuted to (i, f, o, g) in the wrapper so a single
    sigmoid pass covers [:, :3H] and a single tanh pass covers [:, 3H:].
    """
    TC, NB, D = x_ref.shape
    H = h_scr.shape[-1]

    # ---- carry reset at the start of each agent block's time sweep ----------
    @pl.when(pl.program_id(1) == 0)
    def _():
        h_scr[...] = jnp.zeros_like(h_scr)
        c_scr[...] = jnp.zeros_like(c_scr)

    # ---- batched input path for the whole chunk (off the serial chain) ------
    # Input layer has K == input_size (2): broadcast FMAs on the VPU instead of
    # a near-empty MXU contraction.
    x2 = x_ref[...].reshape(TC * NB, D)
    emb = b_in_ref[...] + x2[:, 0:1] * w_in_ref[0:1, :]
    for d in range(1, D):                                  # static, tiny D
        emb = emb + x2[:, d:d + 1] * w_in_ref[d:d + 1, :]
    emb = jnp.maximum(emb, 0.0)
    gx_ref[...] = (jnp.dot(emb, w_ih_ref[...],
                           preferred_element_type=jnp.float32)
                   + b_gate_ref[...])                      # (TC*NB, 4H)

    # ---- serial LSTM recurrence over the chunk -------------------------------
    # TODO(synk): hold W_hh staged in the MXU across steps with
    # pltpu.matmul_push_rhs / matmul_acc_lhs / matmul_pop; for now rely on
    # Mosaic hoisting the weight push out of the loop.
    def step(t, carry):
        h, c = carry
        row = pl.multiple_of(t * NB, NB)                   # sublane-aligned
        gates = gx_ref[pl.ds(row, NB), :] + jnp.dot(
            h, w_hh_ref[...], preferred_element_type=jnp.float32)   # (NB, 4H)
        sig = jax.nn.sigmoid(gates[:, :3 * H])             # i, f, o (1 EUP pass)
        g_g = jnp.tanh(gates[:, 3 * H:])                   # g       (1 EUP pass)
        i_g = sig[:, 0 * H:1 * H]
        f_g = sig[:, 1 * H:2 * H]
        o_g = sig[:, 2 * H:3 * H]
        c_new = f_g * c + i_g * g_g
        h_new = o_g * jnp.tanh(c_new)
        h_hist_ref[t] = h_new                              # lane-dense (NB, H)
        return (h_new, c_new)

    h_fin, c_fin = jax.lax.fori_loop(
        0, TC, step, (h_scr[...], c_scr[...]), unroll=min(TC, 4))
    h_scr[...] = h_fin
    c_scr[...] = c_fin


def _permute_gates_ifog(w):
    """Reorder LSTM gate blocks along the last axis: (i, f, g, o) -> (i, f, o, g)."""
    H = w.shape[-1] // 4
    return jnp.concatenate(
        [w[..., 0 * H:1 * H], w[..., 1 * H:2 * H],
         w[..., 3 * H:4 * H], w[..., 2 * H:3 * H]], axis=-1)


def _vmem_bytes(shape, itemsize=4):
    """Bytes of a VMEM buffer after (8, 128) tile padding of the last two dims."""
    s = list(shape)
    if len(s) >= 1:
        s[-1] = -(-s[-1] // 128) * 128
    if len(s) >= 2:
        s[-2] = -(-s[-2] // 8) * 8
    n = itemsize
    for d in s:
        n *= d
    return n


def lstm_net_forward(x, params, *, time_chunk=None, agent_block=None):
    """x: (num_agents, seq_len, input_size) f32 -> (num_agents, seq_len, output_size)."""
    N, T, D_in = x.shape
    w_in, b_in, w_ih, w_hh, b_ih, b_hh, w_out, b_out = params
    E = w_in.shape[1]
    H = w_hh.shape[0]
    O = w_out.shape[1]
    assert D_in == O, "rel_out=True requires input_size == output_size"
    assert H % 128 == 0, "hidden_size must be a multiple of 128 (lane tile)"
    assert N % 8 == 0, "num_agents must be a multiple of 8 (sublane tile)"

    if time_chunk is None:  # largest divisor of T that is <= 16
        time_chunk = next(tc for tc in range(min(T, 16), 0, -1) if T % tc == 0)
    TC = time_chunk
    NB = N if agent_block is None else agent_block  # pass N//2 on v7x
    assert T % TC == 0
    assert N % NB == 0 and NB % 8 == 0

    # ---- wrapper-side param prep (gate reorder + fused bias) -----------------
    w_ih_r = _permute_gates_ifog(w_ih)
    w_hh_r = _permute_gates_ifog(w_hh)
    b_gate = _permute_gates_ifog(b_ih + b_hh).reshape(1, 4 * H)
    b_in2 = b_in.reshape(1, E)

    # Time-major layout so each grid step DMAs one contiguous (TC, NB, *) block.
    x_tm = jnp.transpose(x, (1, 0, 2))                    # (T, N, D_in)

    grid = (N // NB, T // TC)

    # Scoped-VMEM estimate: x2 for every double-buffered spec + scratch + margin.
    vmem = 0
    for shp in [(TC, NB, D_in), (D_in, E), (1, E), (E, 4 * H), (H, 4 * H),
                (1, 4 * H), (TC, NB, H)]:
        vmem += 2 * _vmem_bytes(shp)
    vmem += _vmem_bytes((TC * NB, 4 * H)) + 2 * _vmem_bytes((NB, H))
    vmem_limit = int(vmem + (16 << 20))                   # headroom, << 64 MiB

    h_hist = pl.pallas_call(
        _lstm_chunk_kernel,
        out_shape=jax.ShapeDtypeStruct((T, N, H), jnp.float32),
        grid=grid,
        in_specs=[
            pl.BlockSpec((TC, NB, D_in), lambda a, t: (t, a, 0)),
            pl.BlockSpec((D_in, E), lambda a, t: (0, 0)),
            pl.BlockSpec((1, E), lambda a, t: (0, 0)),
            pl.BlockSpec((E, 4 * H), lambda a, t: (0, 0)),
            pl.BlockSpec((H, 4 * H), lambda a, t: (0, 0)),
            pl.BlockSpec((1, 4 * H), lambda a, t: (0, 0)),
        ],
        out_specs=pl.BlockSpec((TC, NB, H), lambda a, t: (t, a, 0)),
        scratch_shapes=[
            pltpu.VMEM((TC * NB, 4 * H), jnp.float32),    # chunk gate pre-acts
            pltpu.VMEM((NB, H), jnp.float32),             # h carry
            pltpu.VMEM((NB, H), jnp.float32),             # c carry
        ],
        compiler_params=pltpu.CompilerParams(
            dimension_semantics=("parallel", "arbitrary"),
            vmem_limit_bytes=vmem_limit),
    )(x_tm, w_in, b_in2, w_ih_r, w_hh_r, b_gate)

    # Tiny H -> O=2 projection + rel_out residual done in XLA (kernel output
    # stays lane-dense).
    h_nt = jnp.transpose(h_hist, (1, 0, 2))               # (N, T, H)
    return x + (jnp.einsum('nth,ho->nto', h_nt, w_out) + b_out)


def _reference_forward(x, params):
    """Pure-JAX reference mirroring the PyTorch forward (for self-check)."""
    w_in, b_in, w_ih, w_hh, b_ih, b_hh, w_out, b_out = params
    N, T, _ = x.shape
    H = w_hh.shape[0]
    h = jnp.zeros((N, H), jnp.float32)
    c = jnp.zeros((N, H), jnp.float32)
    preds = []
    for t in range(T):
        x_t = x[:, t, :]
        embed = jax.nn.relu(x_t @ w_in + b_in)
        gates = embed @ w_ih + b_ih + h @ w_hh + b_hh
        i_g = jax.nn.sigmoid(gates[:, 0 * H:1 * H])
        f_g = jax.nn.sigmoid(gates[:, 1 * H:2 * H])
        g_g = jnp.tanh(gates[:, 2 * H:3 * H])
        o_g = jax.nn.sigmoid(gates[:, 3 * H:4 * H])
        c = f_g * c + i_g * g_g
        h = o_g * jnp.tanh(c)
        preds.append(x_t + (h @ w_out + b_out))
    return jnp.stack(preds, axis=1)


def _init_params(key, input_size, embed_size, hidden_size, output_size):
    ks = jax.random.split(key, 8)
    s = 0.1
    w_in = s * jax.random.normal(ks[0], (input_size, embed_size), jnp.float32)
    b_in = s * jax.random.normal(ks[1], (embed_size,), jnp.float32)
    w_ih = s * jax.random.normal(ks[2], (embed_size, 4 * hidden_size), jnp.float32)
    w_hh = s * jax.random.normal(ks[3], (hidden_size, 4 * hidden_size), jnp.float32)
    b_ih = s * jax.random.normal(ks[4], (4 * hidden_size,), jnp.float32)
    b_hh = s * jax.random.normal(ks[5], (4 * hidden_size,), jnp.float32)
    w_out = s * jax.random.normal(ks[6], (hidden_size, output_size), jnp.float32)
    b_out = s * jax.random.normal(ks[7], (output_size,), jnp.float32)
    return (w_in, b_in, w_ih, w_hh, b_ih, b_hh, w_out, b_out)


if __name__ == "__main__":
    # Small shapes consistent with the module defaults (rel_out => in == out).
    num_agents, seq_len = 16, 8
    input_size, embed_size, hidden_size, output_size = 2, 64, 128, 2

    key = jax.random.PRNGKey(0)
    k_x, k_p = jax.random.split(key)
    x = jax.random.normal(k_x, (num_agents, seq_len, input_size), jnp.float32)
    params = _init_params(k_p, input_size, embed_size, hidden_size, output_size)

    # 2 agent blocks x 2 time chunks exercises the parallel axis and the
    # persistent h/c carry + its reset.
    fwd = jax.jit(functools.partial(lstm_net_forward, time_chunk=4, agent_block=8))
    y = jax.block_until_ready(fwd(x, params))

    y_ref = _reference_forward(x, params)
    assert y.shape == (num_agents, seq_len, output_size)
    assert jnp.allclose(y, y_ref, atol=1e-4, rtol=1e-4), \
        float(jnp.max(jnp.abs(y - y_ref)))

    print("KERNEL_OK")
</pallas_src>

<mosaic_0001>
module attributes {stable_mosaic.version = 11 : i64} {
  func.func @_lstm_chunk_kernel(%arg0: i32, %arg1: i32, %arg2: memref<4x8x2xf32, #tpu.memory_space<vmem>>, %arg3: memref<2x64xf32, #tpu.memory_space<vmem>>, %arg4: memref<1x64xf32, #tpu.memory_space<vmem>>, %arg5: memref<64x512xf32, #tpu.memory_space<vmem>>, %arg6: memref<128x512xf32, #tpu.memory_space<vmem>>, %arg7: memref<1x512xf32, #tpu.memory_space<vmem>>, %arg8: memref<4x8x128xf32, #tpu.memory_space<vmem>>, %arg9: memref<32x512xf32, #tpu.memory_space<vmem>>, %arg10: memref<8x128xf32, #tpu.memory_space<vmem>>, %arg11: memref<8x128xf32, #tpu.memory_space<vmem>>) attributes {dimension_semantics = [#tpu.dimension_semantics<parallel>, #tpu.dimension_semantics<arbitrary>], iteration_bounds = array<i64: 2, 2>, scalar_prefetch = 0 : i64, scratch_operands = 3 : i64, tpu.core_type = #tpu.core_type<tc>, window_params = [{transform_indices = @transform_0, window_bounds = array<i64: 4, 8, 2>}, {pipeline_mode = #tpu.pipeline_mode<synchronous>, transform_indices = @transform_1, window_bounds = array<i64: 2, 64>}, {pipeline_mode = #tpu.pipeline_mode<synchronous>, transform_indices = @transform_2, window_bounds = array<i64: 1, 64>}, {pipeline_mode = #tpu.pipeline_mode<synchronous>, transform_indices = @transform_3, window_bounds = array<i64: 64, 512>}, {pipeline_mode = #tpu.pipeline_mode<synchronous>, transform_indices = @transform_4, window_bounds = array<i64: 128, 512>}, {pipeline_mode = #tpu.pipeline_mode<synchronous>, transform_indices = @transform_5, window_bounds = array<i64: 1, 512>}, {transform_indices = @transform_6, window_bounds = array<i64: 4, 8, 128>}]} {
    %c0_i32 = arith.constant 0 : i32
    %0 = arith.cmpi eq, %arg1, %c0_i32 : i32
    %1 = arith.extui %0 : i1 to i32
    %c0_i32_0 = arith.constant 0 : i32
    %2 = arith.cmpi ne, %1, %c0_i32_0 : i32
    scf.if %2 {
      %cst_55 = arith.constant 0.000000e+00 : f32
      %139 = vector.broadcast %cst_55 : f32 to vector<8x128xf32>
      %c0_56 = arith.constant 0 : index
      %c0_57 = arith.constant 0 : index
      %140 = vector.load %arg10[%c0_56, %c0_57] : memref<8x128xf32, #tpu.memory_space<vmem>>, vector<8x128xf32>
      tpu.vector_store %arg10[%c0_56, %c0_57], %139 {strides = array<i32>} : memref<8x128xf32, #tpu.memory_space<vmem>>, vector<8x128xf32>,
      %cst_58 = arith.constant 0.000000e+00 : f32
      %141 = vector.broadcast %cst_58 : f32 to vector<8x128xf32>
      %c0_59 = arith.constant 0 : index
      %c0_60 = arith.constant 0 : index
      %142 = vector.load %arg11[%c0_59, %c0_60] : memref<8x128xf32, #tpu.memory_space<vmem>>, vector<8x128xf32>
      tpu.vector_store %arg11[%c0_59, %c0_60], %141 {strides = array<i32>} : memref<8x128xf32, #tpu.memory_space<vmem>>, vector<8x128xf32>,
    } else {
    }
    %c0 = arith.constant 0 : index
    %c0_1 = arith.constant 0 : index
    %c0_2 = arith.constant 0 : index
    %3 = vector.load %arg2[%c0, %c0_1, %c0_2] : memref<4x8x2xf32, #tpu.memory_space<vmem>>, vector<4x8x2xf32>
    %4 = vector.shape_cast %3 : vector<4x8x2xf32> to vector<32x2xf32>
    %c0_3 = arith.constant 0 : index
    %c0_4 = arith.constant 0 : index
    %5 = vector.load %arg4[%c0_3, %c0_4] : memref<1x64xf32, #tpu.memory_space<vmem>>, vector<1x64xf32>
    %6 = vector.extract_strided_slice %4 {offsets = [0, 0], sizes = [32, 1], strides = [1, 1]} : vector<32x2xf32> to vector<32x1xf32>
    %c0_5 = arith.constant 0 : index
    %c0_6 = arith.constant 0 : index
    %7 = vector.load %arg3[%c0_5, %c0_6] : memref<2x64xf32, #tpu.memory_space<vmem>>, vector<1x64xf32>
    %8 = vector.broadcast %6 : vector<32x1xf32> to vector<32x64xf32>
    %9 = vector.broadcast %7 : vector<1x64xf32> to vector<32x64xf32>
    %10 = arith.mulf %8, %9 : vector<32x64xf32>
    %11 = vector.broadcast %5 : vector<1x64xf32> to vector<32x64xf32>
    %12 = arith.addf %11, %10 : vector<32x64xf32>
    %13 = vector.extract_strided_slice %4 {offsets = [0, 1], sizes = [32, 1], strides = [1, 1]} : vector<32x2xf32> to vector<32x1xf32>
    %c1 = arith.constant 1 : index
    %c0_7 = arith.constant 0 : index
    %14 = vector.load %arg3[%c1, %c0_7] : memref<2x64xf32, #tpu.memory_space<vmem>>, vector<1x64xf32>
    %15 = vector.broadcast %13 : vector<32x1xf32> to vector<32x64xf32>
    %16 = vector.broadcast %14 : vector<1x64xf32> to vector<32x64xf32>
    %17 = arith.mulf %15, %16 : vector<32x64xf32>
    %18 = arith.addf %12, %17 : vector<32x64xf32>
    %cst = arith.constant 0.000000e+00 : f32
    %19 = vector.broadcast %cst : f32 to vector<32x64xf32>
    %20 = arith.maximumf %18, %19 : vector<32x64xf32>
    %c0_8 = arith.constant 0 : index
    %c0_9 = arith.constant 0 : index
    %21 = vector.load %arg5[%c0_8, %c0_9] : memref<64x512xf32, #tpu.memory_space<vmem>>, vector<64x512xf32>
    %cst_10 = arith.constant dense<0.000000e+00> : vector<32x512xf32>
    %22 = tpu.matmul %20, %21, %cst_10 {dimension_numbers = #tpu.dot_dimension_numbers<[1], [0], [0], [1], [0, 0, 1, 1], [], []>} : vector<32x64xf32>, vector<64x512xf32>, vector<32x512xf32> -> vector<32x512xf32>
    %c0_11 = arith.constant 0 : index
    %c0_12 = arith.constant 0 : index
    %23 = vector.load %arg7[%c0_11, %c0_12] : memref<1x512xf32, #tpu.memory_space<vmem>>, vector<1x512xf32>
    %24 = vector.broadcast %23 : vector<1x512xf32> to vector<32x512xf32>
    %25 = arith.addf %22, %24 : vector<32x512xf32>
    %c0_13 = arith.constant 0 : index
    %c0_14 = arith.constant 0 : index
    %26 = vector.load %arg9[%c0_13, %c0_14] : memref<32x512xf32, #tpu.memory_space<vmem>>, vector<32x512xf32>
    tpu.vector_store %arg9[%c0_13, %c0_14], %25 {strides = array<i32>} : memref<32x512xf32, #tpu.memory_space<vmem>>, vector<32x512xf32>,
    %c0_15 = arith.constant 0 : index
    %c0_16 = arith.constant 0 : index
    %27 = vector.load %arg10[%c0_15, %c0_16] : memref<8x128xf32, #tpu.memory_space<vmem>>, vector<8x128xf32>
    %c0_17 = arith.constant 0 : index
    %c0_18 = arith.constant 0 : index
    %28 = vector.load %arg11[%c0_17, %c0_18] : memref<8x128xf32, #tpu.memory_space<vmem>>, vector<8x128xf32>
    %c0_i32_19 = arith.constant 0 : i32
    %c8_i32 = arith.constant 8 : i32
    %29 = arith.muli %c0_i32_19, %c8_i32 : i32
    %30 = tpu.assume_multiple %29, 8 : i32
    %31 = arith.index_cast %30 : i32 to index
    %c0_20 = arith.constant 0 : index
    %32 = vector.load %arg9[%31, %c0_20] : memref<32x512xf32, #tpu.memory_space<vmem>>, vector<8x512xf32>
    %c0_21 = arith.constant 0 : index
    %c0_22 = arith.constant 0 : index
    %33 = vector.load %arg6[%c0_21, %c0_22] : memref<128x512xf32, #tpu.memory_space<vmem>>, vector<128x512xf32>
    %cst_23 = arith.constant dense<0.000000e+00> : vector<8x512xf32>
    %34 = tpu.matmul %27, %33, %cst_23 {dimension_numbers = #tpu.dot_dimension_numbers<[1], [0], [0], [1], [0, 0, 1, 1], [], []>} : vector<8x128xf32>, vector<128x512xf32>, vector<8x512xf32> -> vector<8x512xf32>
    %35 = arith.addf %32, %34 : vector<8x512xf32>
    %36 = vector.extract_strided_slice %35 {offsets = [0, 0], sizes = [8, 384], strides = [1, 1]} : vector<8x512xf32> to vector<8x384xf32>
    %37 = arith.negf %36 : vector<8x384xf32>
    %38 = math.exp %37 : vector<8x384xf32>
    %cst_24 = arith.constant 1.000000e+00 : f32
    %39 = vector.broadcast %cst_24 : f32 to vector<8x384xf32>
    %40 = arith.addf %39, %38 : vector<8x384xf32>
    %41 = arith.divf %39, %40 : vector<8x384xf32>
    %42 = vector.extract_strided_slice %35 {offsets = [0, 384], sizes = [8, 128], strides = [1, 1]} : vector<8x512xf32> to vector<8x128xf32>
    %43 = math.tanh %42 : vector<8x128xf32>
    %44 = vector.extract_strided_slice %41 {offsets = [0, 0], sizes = [8, 128], strides = [1, 1]} : vector<8x384xf32> to vector<8x128xf32>
    %45 = vector.extract_strided_slice %41 {offsets = [0, 128], sizes = [8, 128], strides = [1, 1]} : vector<8x384xf32> to vector<8x128xf32>
    %46 = vector.extract_strided_slice %41 {offsets = [0, 256], sizes = [8, 128], strides = [1, 1]} : vector<8x384xf32> to vector<8x128xf32>
    %47 = arith.mulf %45, %28 : vector<8x128xf32>
    %48 = arith.mulf %44, %43 : vector<8x128xf32>
    %49 = arith.addf %47, %48 : vector<8x128xf32>
    %50 = math.tanh %49 : vector<8x128xf32>
    %51 = arith.mulf %46, %50 : vector<8x128xf32>
    %52 = arith.index_cast %c0_i32_19 : i32 to index
    %c0_25 = arith.constant 0 : index
    %c0_26 = arith.constant 0 : index
    %53 = vector.load %arg8[%52, %c0_25, %c0_26] : memref<4x8x128xf32, #tpu.memory_space<vmem>>, vector<1x8x128xf32>
    %54 = vector.shape_cast %53 : vector<1x8x128xf32> to vector<8x128xf32>
    %55 = vector.shape_cast %51 : vector<8x128xf32> to vector<1x8x128xf32>
    tpu.vector_store %arg8[%52, %c0_25, %c0_26], %55 {strides = array<i32>} : memref<4x8x128xf32, #tpu.memory_space<vmem>>, vector<1x8x128xf32>,
    %c1_i32 = arith.constant 1 : i32
    %c8_i32_27 = arith.constant 8 : i32
    %56 = arith.muli %c1_i32, %c8_i32_27 : i32
    %57 = tpu.assume_multiple %56, 8 : i32
    %58 = arith.index_cast %57 : i32 to index
    %c0_28 = arith.constant 0 : index
    %59 = vector.load %arg9[%58, %c0_28] : memref<32x512xf32, #tpu.memory_space<vmem>>, vector<8x512xf32>
    %c0_29 = arith.constant 0 : index
    %c0_30 = arith.constant 0 : index
    %60 = vector.load %arg6[%c0_29, %c0_30] : memref<128x512xf32, #tpu.memory_space<vmem>>, vector<128x512xf32>
    %cst_31 = arith.constant dense<0.000000e+00> : vector<8x512xf32>
    %61 = tpu.matmul %51, %60, %cst_31 {dimension_numbers = #tpu.dot_dimension_numbers<[1], [0], [0], [1], [0, 0, 1, 1], [], []>} : vector<8x128xf32>, vector<128x512xf32>, vector<8x512xf32> -> vector<8x512xf32>
    %62 = arith.addf %59, %61 : vector<8x512xf32>
    %63 = vector.extract_strided_slice %62 {offsets = [0, 0], sizes = [8, 384], strides = [1, 1]} : vector<8x512xf32> to vector<8x384xf32>
    %64 = arith.negf %63 : vector<8x384xf32>
    %65 = math.exp %64 : vector<8x384xf32>
    %cst_32 = arith.constant 1.000000e+00 : f32
    %66 = vector.broadcast %cst_32 : f32 to vector<8x384xf32>
    %67 = arith.addf %66, %65 : vector<8x384xf32>
    %68 = arith.divf %66, %67 : vector<8x384xf32>
    %69 = vector.extract_strided_slice %62 {offsets = [0, 384], sizes = [8, 128], strides = [1, 1]} : vector<8x512xf32> to vector<8x128xf32>
    %70 = math.tanh %69 : vector<8x128xf32>
    %71 = vector.extract_strided_slice %68 {offsets = [0, 0], sizes = [8, 128], strides = [1, 1]} : vector<8x384xf32> to vector<8x128xf32>
    %72 = vector.extract_strided_slice %68 {offsets = [0, 128], sizes = [8, 128], strides = [1, 1]} : vector<8x384xf32> to vector<8x128xf32>
    %73 = vector.extract_strided_slice %68 {offsets = [0, 256], sizes = [8, 128], strides = [1, 1]} : vector<8x384xf32> to vector<8x128xf32>
    %74 = arith.mulf %72, %49 : vector<8x128xf32>
    %75 = arith.mulf %71, %70 : vector<8x128xf32>
    %76 = arith.addf %74, %75 : vector<8x128xf32>
    %77 = math.tanh %76 : vector<8x128xf32>
    %78 = arith.mulf %73, %77 : vector<8x128xf32>
    %79 = arith.index_cast %c1_i32 : i32 to index
    %c0_33 = arith.constant 0 : index
    %c0_34 = arith.constant 0 : index
    %80 = vector.load %arg8[%79, %c0_33, %c0_34] : memref<4x8x128xf32, #tpu.memory_space<vmem>>, vector<1x8x128xf32>
    %81 = vector.shape_cast %80 : vector<1x8x128xf32> to vector<8x128xf32>
    %82 = vector.shape_cast %78 : vector<8x128xf32> to vector<1x8x128xf32>
    tpu.vector_store %arg8[%79, %c0_33, %c0_34], %82 {strides = array<i32>} : memref<4x8x128xf32, #tpu.memory_space<vmem>>, vector<1x8x128xf32>,
    %c2_i32 = arith.constant 2 : i32
    %c8_i32_35 = arith.constant 8 : i32
    %83 = arith.muli %c2_i32, %c8_i32_35 : i32
    %84 = tpu.assume_multiple %83, 8 : i32
    %85 = arith.index_cast %84 : i32 to index
    %c0_36 = arith.constant 0 : index
    %86 = vector.load %arg9[%85, %c0_36] : memref<32x512xf32, #tpu.memory_space<vmem>>, vector<8x512xf32>
    %c0_37 = arith.constant 0 : index
    %c0_38 = arith.constant 0 : index
    %87 = vector.load %arg6[%c0_37, %c0_38] : memref<128x512xf32, #tpu.memory_space<vmem>>, vector<128x512xf32>
    %cst_39 = arith.constant dense<0.000000e+00> : vector<8x512xf32>
    %88 = tpu.matmul %78, %87, %cst_39 {dimension_numbers = #tpu.dot_dimension_numbers<[1], [0], [0], [1], [0, 0, 1, 1], [], []>} : vector<8x128xf32>, vector<128x512xf32>, vector<8x512xf32> -> vector<8x512xf32>
    %89 = arith.addf %86, %88 : vector<8x512xf32>
    %90 = vector.extract_strided_slice %89 {offsets = [0, 0], sizes = [8, 384], strides = [1, 1]} : vector<8x512xf32> to vector<8x384xf32>
    %91 = arith.negf %90 : vector<8x384xf32>
    %92 = math.exp %91 : vector<8x384xf32>
    %cst_40 = arith.constant 1.000000e+00 : f32
    %93 = vector.broadcast %cst_40 : f32 to vector<8x384xf32>
    %94 = arith.addf %93, %92 : vector<8x384xf32>
    %95 = arith.divf %93, %94 : vector<8x384xf32>
    %96 = vector.extract_strided_slice %89 {offsets = [0, 384], sizes = [8, 128], strides = [1, 1]} : vector<8x512xf32> to vector<8x128xf32>
    %97 = math.tanh %96 : vector<8x128xf32>
    %98 = vector.extract_strided_slice %95 {offsets = [0, 0], sizes = [8, 128], strides = [1, 1]} : vector<8x384xf32> to vector<8x128xf32>
    %99 = vector.extract_strided_slice %95 {offsets = [0, 128], sizes = [8, 128], strides = [1, 1]} : vector<8x384xf32> to vector<8x128xf32>
    %100 = vector.extract_strided_slice %95 {offsets = [0, 256], sizes = [8, 128], strides = [1, 1]} : vector<8x384xf32> to vector<8x128xf32>
    %101 = arith.mulf %99, %76 : vector<8x128xf32>
    %102 = arith.mulf %98, %97 : vector<8x128xf32>
    %103 = arith.addf %101, %102 : vector<8x128xf32>
    %104 = math.tanh %103 : vector<8x128xf32>
    %105 = arith.mulf %100, %104 : vector<8x128xf32>
    %106 = arith.index_cast %c2_i32 : i32 to index
    %c0_41 = arith.constant 0 : index
    %c0_42 = arith.constant 0 : index
    %107 = vector.load %arg8[%106, %c0_41, %c0_42] : memref<4x8x128xf32, #tpu.memory_space<vmem>>, vector<1x8x128xf32>
    %108 = vector.shape_cast %107 : vector<1x8x128xf32> to vector<8x128xf32>
    %109 = vector.shape_cast %105 : vector<8x128xf32> to vector<1x8x128xf32>
    tpu.vector_store %arg8[%106, %c0_41, %c0_42], %109 {strides = array<i32>} : memref<4x8x128xf32, #tpu.memory_space<vmem>>, vector<1x8x128xf32>,
    %c3_i32 = arith.constant 3 : i32
    %c8_i32_43 = arith.constant 8 : i32
    %110 = arith.muli %c3_i32, %c8_i32_43 : i32
    %111 = tpu.assume_multiple %110, 8 : i32
    %112 = arith.index_cast %111 : i32 to index
    %c0_44 = arith.constant 0 : index
    %113 = vector.load %arg9[%112, %c0_44] : memref<32x512xf32, #tpu.memory_space<vmem>>, vector<8x512xf32>
    %c0_45 = arith.constant 0 : index
    %c0_46 = arith.constant 0 : index
    %114 = vector.load %arg6[%c0_45, %c0_46] : memref<128x512xf32, #tpu.memory_space<vmem>>, vector<128x512xf32>
    %cst_47 = arith.constant dense<0.000000e+00> : vector<8x512xf32>
    %115 = tpu.matmul %105, %114, %cst_47 {dimension_numbers = #tpu.dot_dimension_numbers<[1], [0], [0], [1], [0, 0, 1, 1], [], []>} : vector<8x128xf32>, vector<128x512xf32>, vector<8x512xf32> -> vector<8x512xf32>
    %116 = arith.addf %113, %115 : vector<8x512xf32>
    %117 = vector.extract_strided_slice %116 {offsets = [0, 0], sizes = [8, 384], strides = [1, 1]} : vector<8x512xf32> to vector<8x384xf32>
    %118 = arith.negf %117 : vector<8x384xf32>
    %119 = math.exp %118 : vector<8x384xf32>
    %cst_48 = arith.constant 1.000000e+00 : f32
    %120 = vector.broadcast %cst_48 : f32 to vector<8x384xf32>
    %121 = arith.addf %120, %119 : vector<8x384xf32>
    %122 = arith.divf %120, %121 : vector<8x384xf32>
    %123 = vector.extract_strided_slice %116 {offsets = [0, 384], sizes = [8, 128], strides = [1, 1]} : vector<8x512xf32> to vector<8x128xf32>
    %124 = math.tanh %123 : vector<8x128xf32>
    %125 = vector.extract_strided_slice %122 {offsets = [0, 0], sizes = [8, 128], strides = [1, 1]} : vector<8x384xf32> to vector<8x128xf32>
    %126 = vector.extract_strided_slice %122 {offsets = [0, 128], sizes = [8, 128], strides = [1, 1]} : vector<8x384xf32> to vector<8x128xf32>
    %127 = vector.extract_strided_slice %122 {offsets = [0, 256], sizes = [8, 128], strides = [1, 1]} : vector<8x384xf32> to vector<8x128xf32>
    %128 = arith.mulf %126, %103 : vector<8x128xf32>
    %129 = arith.mulf %125, %124 : vector<8x128xf32>
    %130 = arith.addf %128, %129 : vector<8x128xf32>
    %131 = math.tanh %130 : vector<8x128xf32>
    %132 = arith.mulf %127, %131 : vector<8x128xf32>
    %133 = arith.index_cast %c3_i32 : i32 to index
    %c0_49 = arith.constant 0 : index
    %c0_50 = arith.constant 0 : index
    %134 = vector.load %arg8[%133, %c0_49, %c0_50] : memref<4x8x128xf32, #tpu.memory_space<vmem>>, vector<1x8x128xf32>
    %135 = vector.shape_cast %134 : vector<1x8x128xf32> to vector<8x128xf32>
    %136 = vector.shape_cast %132 : vector<8x128xf32> to vector<1x8x128xf32>
    tpu.vector_store %arg8[%133, %c0_49, %c0_50], %136 {strides = array<i32>} : memref<4x8x128xf32, #tpu.memory_space<vmem>>, vector<1x8x128xf32>,
    %c4_i32 = arith.constant 4 : i32
    %c0_51 = arith.constant 0 : index
    %c0_52 = arith.constant 0 : index
    %137 = vector.load %arg10[%c0_51, %c0_52] : memref<8x128xf32, #tpu.memory_space<vmem>>, vector<8x128xf32>
    tpu.vector_store %arg10[%c0_51, %c0_52], %132 {strides = array<i32>} : memref<8x128xf32, #tpu.memory_space<vmem>>, vector<8x128xf32>,
    %c0_53 = arith.constant 0 : index
    %c0_54 = arith.constant 0 : index
    %138 = vector.load %arg11[%c0_53, %c0_54] : memref<8x128xf32, #tpu.memory_space<vmem>>, vector<8x128xf32>
    tpu.vector_store %arg11[%c0_53, %c0_54], %130 {strides = array<i32>} : memref<8x128xf32, #tpu.memory_space<vmem>>, vector<8x128xf32>,
    return
  }
  func.func @transform_0(%arg0: i32, %arg1: i32) -> (i32, i32, i32) {
    %c0_i32 = arith.constant 0 : i32
    %c0_i32_0 = arith.constant 0 : i32
    return %arg1, %arg0, %c0_i32 : i32, i32, i32
  }
  func.func @transform_1(%arg0: i32, %arg1: i32) -> (i32, i32) {
    %c0_i32 = arith.constant 0 : i32
    %c0_i32_0 = arith.constant 0 : i32
    %c0_i32_1 = arith.constant 0 : i32
    return %c0_i32, %c0_i32_0 : i32, i32
  }
  func.func @transform_2(%arg0: i32, %arg1: i32) -> (i32, i32) {
    %c0_i32 = arith.constant 0 : i32
    %c0_i32_0 = arith.constant 0 : i32
    %c0_i32_1 = arith.constant 0 : i32
    return %c0_i32, %c0_i32_0 : i32, i32
  }
  func.func @transform_3(%arg0: i32, %arg1: i32) -> (i32, i32) {
    %c0_i32 = arith.constant 0 : i32
    %c0_i32_0 = arith.constant 0 : i32
    %c0_i32_1 = arith.constant 0 : i32
    return %c0_i32, %c0_i32_0 : i32, i32
  }
  func.func @transform_4(%arg0: i32, %arg1: i32) -> (i32, i32) {
    %c0_i32 = arith.constant 0 : i32
    %c0_i32_0 = arith.constant 0 : i32
    %c0_i32_1 = arith.constant 0 : i32
    return %c0_i32, %c0_i32_0 : i32, i32
  }
  func.func @transform_5(%arg0: i32, %arg1: i32) -> (i32, i32) {
    %c0_i32 = arith.constant 0 : i32
    %c0_i32_0 = arith.constant 0 : i32
    %c0_i32_1 = arith.constant 0 : i32
    return %c0_i32, %c0_i32_0 : i32, i32
  }
  func.func @transform_6(%arg0: i32, %arg1: i32) -> (i32, i32, i32) {
    %c0_i32 = arith.constant 0 : i32
    %c0_i32_0 = arith.constant 0 : i32
    return %arg1, %arg0, %c0_i32 : i32, i32, i32
  }
}

</mosaic_0001>

<llo_original>
// kernel: lstm_net_forward.1
$region0: #{lstm_net_forward.1}
  #allocation0 [shape = 'u32[]', space=smem, size = 0x4, offset = 0x4, fixed_abs, tag = 'smem constant byte address 0x4 - core index']
  #allocation1 [shape = 'u32[144,128]{1,0:T(1,128)}', space=vmem, size = 0x12000, scoped, tag = 'internal scratch']
  #allocation2 [shape = 'f32[32,512]{1,0:T(8,128)}', space=vmem, size = 0x10000, scoped, tag = 'scratch operand']
  #allocation3 [shape = 'f32[8,128]{1,0:T(8,128)}', space=vmem, size = 0x1000, scoped, tag = 'scratch operand']
  #allocation4 [shape = 'f32[8,128]{1,0:T(8,128)}', space=vmem, size = 0x1000, scoped, tag = 'scratch operand']
  %s0 = inlined_call_operand.vmem [shape: f32[8,16,2], index: 0, kind: input, shape index: {}]
  %s1 = inlined_call_operand.vmem [shape: f32[2,64], index: 1, kind: input, shape index: {}]
  %s2 = inlined_call_operand.vmem [shape: f32[1,64], index: 2, kind: input, shape index: {}]
  %s3 = inlined_call_operand.vmem [shape: f32[64,512], index: 3, kind: input, shape index: {}]
  %s4 = inlined_call_operand.vmem [shape: f32[128,512], index: 4, kind: input, shape index: {}]
  %s5 = inlined_call_operand.vmem [shape: f32[1,512], index: 5, kind: input, shape index: {}]
  %s6 = inlined_call_operand.vmem [shape: f32[8,16,128], index: 6, kind: output, shape index: {}]
  %s7 = sld [smem:[#allocation0]]
  $region133: #{lstm_net_forward.1} parent=0
    _
  %s9 = ssub.s32 1, %s7
  %s10 = scalar_select 0, %s9, %s7
  $region1: #{lstm_net_forward.1} parent=0
    #allocation5 [shape = 'u8[32768]{0}', space=vmem, size = 0x8000, scoped, tag = 'input window, operand 0']
    #allocation6 [shape = 'u8[32768]{0}', space=vmem, size = 0x8000, scoped, tag = 'output window, operand 0']
    loop: start=0, step=1, limit=6
    $region2: #{lstm_net_forward.1} parent=1 // loop_pre_header
      _
    $region3: #{lstm_net_forward.1} parent=1 // loop_header
      %s12 = sphi 0, %s16
      %p13 = scmp.ge.s32.totalorder %s12, 6
      %s19 = sphi 0, %s31
      %s20 = sphi 0, %s27
      %s21 = sphi 0, %s19
      %s22 = sphi 0, %s20
      %s23 = sphi 0, %s21
      %s24 = sphi 0, %s22
      %s36 = sphi 0, %s38
      %s39 = sphi 0, %s36
      %s40 = sphi 0, %s39
      %s56 = sphi 0, %s40
      %s60 = sphi 0, %s60
      %s62 = sphi 0, %s60
      %s63 = sphi 0, %s62
      %s77 = sphi 0, %s63
      %s81 = sphi 0, %s81
      %s83 = sphi 0, %s81
      %s84 = sphi 0, %s83
      %s98 = sphi 0, %s84
      %s102 = sphi 0, %s102
      %s104 = sphi 0, %s102
      %s105 = sphi 0, %s104
      %s119 = sphi 0, %s105
      %s123 = sphi 0, %s123
      %s125 = sphi 0, %s123
      %s126 = sphi 0, %s125
      %s140 = sphi 0, %s126
      %s144 = sphi 0, %s144
      %s146 = sphi 0, %s144
      %s147 = sphi 0, %s146
      %s161 = sphi 0, %s147
      %s169 = sphi 0, %s171
      %s172 = sphi 0, %s169
      %s173 = sphi 0, %s172
      %s189 = sphi 0, %s173
    $region4: #{lstm_net_forward.1} parent=1 // loop_header_branch
      %15 = sbr.rel (%p13) target = $region8
    $region5: #{lstm_net_forward.1} parent=1 // loop_body
      %s17 = ssub.s32 %s12, 1
      %s18 = ssub.s32 %s12, 2
      %s25 = sadd.s32 1, %s20
      %p26 = scmp.ge.s32.totalorder %s25, 2
      %s27 = scalar_select %p26, 0, %s25
      %s28 = sadd.s32 1, %s19
      %s29 = scalar_select %p26, %s28, %s19
      %p30 = scmp.ge.s32.totalorder %s29, 2
      %s31 = scalar_select %p30, 0, %s29
      %s32 = ssub.s32 %s20, %s27
      %s33 = ssub.s32 %s19, %s31
      %s34 = sor.u32 %s32, %s33
      %p35 = scmp.eq.s32.totalorder %s34, 0
      %s37 = sadd.s32 %s36, 1
      %s38 = scalar_select %p35, %s36, %s37
      %p41 = pneg %p35
      %p42 = scmp.eq.s32.totalorder %s12, 3
      %p43 = por %p41, %p42
      %p44 = scmp.ne.s32.totalorder %s36, %s39
      %p45 = scmp.eq.s32.totalorder %s12, 0
      %p46 = por %p44, %p45
      %p47 = scmp.ne.s32.totalorder %s36, %s39
      %p48 = scmp.eq.s32.totalorder %s17, 3
      %p49 = por %p47, %p48
      %p50 = scmp.ne.s32.totalorder %s39, %s40
      %p51 = scmp.eq.s32.totalorder %s17, 0
      %p52 = por %p50, %p51
      %p53 = scmp.ne.s32.totalorder %s39, %s40
      %p54 = scmp.eq.s32.totalorder %s18, 3
      %p55 = por %p53, %p54
      %p57 = scmp.ne.s32.totalorder %s40, %s56
      %p58 = scmp.eq.s32.totalorder %s18, 0
      %p59 = por %p57, %p58
      %s61 = sadd.s32 %s60, 1
      %p64 = scmp.eq.s32.totalorder %s12, 3
      %p65 = scmp.ne.s32.totalorder %s60, %s62
      %p66 = scmp.eq.s32.totalorder %s12, 0
      %p67 = por %p65, %p66
      %p68 = scmp.ne.s32.totalorder %s60, %s62
      %p69 = scmp.eq.s32.totalorder %s17, 3
      %p70 = por %p68, %p69
      %p71 = scmp.ne.s32.totalorder %s62, %s63
      %p72 = scmp.eq.s32.totalorder %s17, 0
      %p73 = por %p71, %p72
      %p74 = scmp.ne.s32.totalorder %s62, %s63
      %p75 = scmp.eq.s32.totalorder %s18, 3
      %p76 = por %p74, %p75
      %p78 = scmp.ne.s32.totalorder %s63, %s77
      %p79 = scmp.eq.s32.totalorder %s18, 0
      %p80 = por %p78, %p79
      %s82 = sadd.s32 %s81, 1
      %p85 = scmp.eq.s32.totalorder %s12, 3
      %p86 = scmp.ne.s32.totalorder %s81, %s83
      %p87 = scmp.eq.s32.totalorder %s12, 0
      %p88 = por %p86, %p87
      %p89 = scmp.ne.s32.totalorder %s81, %s83
      %p90 = scmp.eq.s32.totalorder %s17, 3
      %p91 = por %p89, %p90
      %p92 = scmp.ne.s32.totalorder %s83, %s84
      %p93 = scmp.eq.s32.totalorder %s17, 0
      %p94 = por %p92, %p93
      %p95 = scmp.ne.s32.totalorder %s83, %s84
      %p96 = scmp.eq.s32.totalorder %s18, 3
      %p97 = por %p95, %p96
      %p99 = scmp.ne.s32.totalorder %s84, %s98
      %p100 = scmp.eq.s32.totalorder %s18, 0
      %p101 = por %p99, %p100
      %s103 = sadd.s32 %s102, 1
      %p106 = scmp.eq.s32.totalorder %s12, 3
      %p107 = scmp.ne.s32.totalorder %s102, %s104
      %p108 = scmp.eq.s32.totalorder %s12, 0
      %p109 = por %p107, %p108
      %p110 = scmp.ne.s32.totalorder %s102, %s104
      %p111 = scmp.eq.s32.totalorder %s17, 3
      %p112 = por %p110, %p111
      %p113 = scmp.ne.s32.totalorder %s104, %s105
      %p114 = scmp.eq.s32.totalorder %s17, 0
      %p115 = por %p113, %p114
      %p116 = scmp.ne.s32.totalorder %s104, %s105
      %p117 = scmp.eq.s32.totalorder %s18, 3
      %p118 = por %p116, %p117
      %p120 = scmp.ne.s32.totalorder %s105, %s119
      %p121 = scmp.eq.s32.totalorder %s18, 0
      %p122 = por %p120, %p121
      %s124 = sadd.s32 %s123, 1
      %p127 = scmp.eq.s32.totalorder %s12, 3
      %p128 = scmp.ne.s32.totalorder %s123, %s125
      %p129 = scmp.eq.s32.totalorder %s12, 0
      %p130 = por %p128, %p129
      %p131 = scmp.ne.s32.totalorder %s123, %s125
      %p132 = scmp.eq.s32.totalorder %s17, 3
      %p133 = por %p131, %p132
      %p134 = scmp.ne.s32.totalorder %s125, %s126
      %p135 = scmp.eq.s32.totalorder %s17, 0
      %p136 = por %p134, %p135
      %p137 = scmp.ne.s32.totalorder %s125, %s126
      %p138 = scmp.eq.s32.totalorder %s18, 3
      %p139 = por %p137, %p138
      %p141 = scmp.ne.s32.totalorder %s126, %s140
      %p142 = scmp.eq.s32.totalorder %s18, 0
      %p143 = por %p141, %p142
      %s145 = sadd.s32 %s144, 1
      %p148 = scmp.eq.s32.totalorder %s12, 3
      %p149 = scmp.ne.s32.totalorder %s144, %s146
      %p150 = scmp.eq.s32.totalorder %s12, 0
      %p151 = por %p149, %p150
      %p152 = scmp.ne.s32.totalorder %s144, %s146
      %p153 = scmp.eq.s32.totalorder %s17, 3
      %p154 = por %p152, %p153
      %p155 = scmp.ne.s32.totalorder %s146, %s147
      %p156 = scmp.eq.s32.totalorder %s17, 0
      %p157 = por %p155, %p156
      %p158 = scmp.ne.s32.totalorder %s146, %s147
      %p159 = scmp.eq.s32.totalorder %s18, 3
      %p160 = por %p158, %p159
      %p162 = scmp.ne.s32.totalorder %s147, %s161
      %p163 = scmp.eq.s32.totalorder %s18, 0
      %p164 = por %p162, %p163
      %s165 = ssub.s32 %s20, %s27
      %s166 = ssub.s32 %s19, %s31
      %s167 = sor.u32 %s165, %s166
      %p168 = scmp.eq.s32.totalorder %s167, 0
      %s170 = sadd.s32 %s169, 1
      %s171 = scalar_select %p168, %s169, %s170
      %p174 = pneg %p168
      %p175 = scmp.eq.s32.totalorder %s12, 3
      %p176 = por %p174, %p175
      %p177 = scmp.ne.s32.totalorder %s169, %s172
      %p178 = scmp.eq.s32.totalorder %s12, 0
      %p179 = por %p177, %p178
      %p180 = scmp.ne.s32.totalorder %s169, %s172
      %p181 = scmp.eq.s32.totalorder %s17, 3
      %p182 = por %p180, %p181
      %p183 = scmp.ne.s32.totalorder %s172, %s173
      %p184 = scmp.eq.s32.totalorder %s17, 0
      %p185 = por %p183, %p184
      %p186 = scmp.ne.s32.totalorder %s172, %s173
      %p187 = scmp.eq.s32.totalorder %s18, 3
      %p188 = por %p186, %p187
      %p190 = scmp.ne.s32.totalorder %s173, %s189
      %p191 = scmp.eq.s32.totalorder %s18, 0
      %p192 = por %p190, %p191
      %p193 = scmp.le.s32.totalorder 1, %s12
      %p194 = scmp.lt.s32.totalorder %s12, 5
      %p195 = pnand %p193, %p194
      %p196 = pneg %p195
      // Predicated region
      $region9: #{lstm_net_forward.1} parent=5 // pred_check
        _
      $region10: #{lstm_net_forward.1} parent=5 // pred_check_branch
        %198 = sbr.rel (%p195) target = $region12
      $region11: #{lstm_net_forward.1} parent=5 // pred_region
        %s199 = ssub.s32 %s12, 1
        // Predicated region
        $region13: #{lstm_net_forward.1} parent=11 // pred_check
          %p200 = pneg %p73
        $region14: #{lstm_net_forward.1} parent=11 // pred_check_branch
          %202 = sbr.rel (%p200) target = $region16
        $region15: #{lstm_net_forward.1} parent=11 // pred_region
          _
        $region16: #{lstm_net_forward.1} parent=11 // pred_fallthru
          _
        // Predicated region
        $region17: #{lstm_net_forward.1} parent=11 // pred_check
          %p203 = pneg %p94
        $region18: #{lstm_net_forward.1} parent=11 // pred_check_branch
          %205 = sbr.rel (%p203) target = $region20
        $region19: #{lstm_net_forward.1} parent=11 // pred_region
          _
        $region20: #{lstm_net_forward.1} parent=11 // pred_fallthru
          _
        // Predicated region
        $region21: #{lstm_net_forward.1} parent=11 // pred_check
          %p206 = pneg %p115
        $region22: #{lstm_net_forward.1} parent=11 // pred_check_branch
          %208 = sbr.rel (%p206) target = $region24
        $region23: #{lstm_net_forward.1} parent=11 // pred_region
          _
        $region24: #{lstm_net_forward.1} parent=11 // pred_fallthru
          _
        // Predicated region
        $region25: #{lstm_net_forward.1} parent=11 // pred_check
          %p209 = pneg %p136
        $region26: #{lstm_net_forward.1} parent=11 // pred_check_branch
          %211 = sbr.rel (%p209) target = $region28
        $region27: #{lstm_net_forward.1} parent=11 // pred_region
          _
        $region28: #{lstm_net_forward.1} parent=11 // pred_fallthru
          _
        // Predicated region
        $region29: #{lstm_net_forward.1} parent=11 // pred_check
          %p212 = pneg %p157
        $region30: #{lstm_net_forward.1} parent=11 // pred_check_branch
          %214 = sbr.rel (%p212) target = $region32
        $region31: #{lstm_net_forward.1} parent=11 // pred_region
          _
        $region32: #{lstm_net_forward.1} parent=11 // pred_fallthru
          _
      $region12: #{lstm_net_forward.1} parent=5 // pred_fallthru
        _
      %p215 = scmp.lt.s32.totalorder %s12, 4
      // Predicated region
      $region33: #{lstm_net_forward.1} parent=5 // pred_check
        %p216 = pneg %p215
      $region34: #{lstm_net_forward.1} parent=5 // pred_check_branch
        %218 = sbr.rel (%p216) target = $region36
      $region35: #{lstm_net_forward.1} parent=5 // pred_region
        // Predicated region
        $region37: #{lstm_net_forward.1} parent=35 // pred_check
          %p219 = pneg %p46
        $region38: #{lstm_net_forward.1} parent=35 // pred_check_branch
          %221 = sbr.rel (%p219) target = $region40
        $region39: #{lstm_net_forward.1} parent=35 // pred_region
          %s222 = sand.u32 %s36, 1
          %s223 = sand.u32 %s36, 1
          %s224 = smul.addr %s223, 32
          %s225 = scalar_lea.vmem [#allocation5], %s224
          %s226 = smul.u32 4, %s20
          %s227 = smul.addr %s226, 2
          %s228 = sadd.s32 %s19, %s227
          %s229 = smul.addr %s228, 8
          %s230 = scalar_lea.vmem %s0, %s229
          // Predicated region
          $region41: #{lstm_net_forward.1} parent=39 // pred_check
            _
          $region42: #{lstm_net_forward.1} parent=39 // pred_check_branch
            %232 = sbr.rel (0) target = $region44
          $region43: #{lstm_net_forward.1} parent=39 // pred_region
            // Predicated region
            $region45: #{lstm_net_forward.1} parent=43 // pred_check
              _
            $region46: #{lstm_net_forward.1} parent=43 // pred_check_branch
              %234 = sbr.rel (0) target = $region48
            $region47: #{lstm_net_forward.1} parent=43 // pred_region
              // Predicated region
              $region60: #{lstm_net_forward.1} parent=47 // pred_check
                _
              $region61: #{lstm_net_forward.1} parent=47 // pred_check_branch
                %255 = sbr.rel (0) target = $region63
              $region62: #{lstm_net_forward.1} parent=47 // pred_region
                loop: start=0, step=1, limit=1
                $region64: #{lstm_net_forward.1} parent=62 // loop_pre_header
                  _
                $region65: #{lstm_net_forward.1} parent=62 // loop_header
                  %s257 = sphi 0, %s261
                  %p258 = scmp.ge.s32.totalorder %s257, 1
                  %s262 = sphi %s230, %s230
                  %s263 = sphi %s225, %s225
                $region66: #{lstm_net_forward.1} parent=62 // loop_header_branch
                  %260 = sbr.rel (%p258) target = $region70
                $region67: #{lstm_net_forward.1} parent=62 // loop_body
                  %v264 = vld [vmem:[%s262] sm:$0xff]
                  %265 = vst [vmem:[%s263] sm:$0xff] %v264
                  %v266 = vld [vmem:[%s262 + $0x10] sm:$0xff]
                  %267 = vst [vmem:[%s263 + $0x8] sm:$0xff] %v266
                  %v268 = vld [vmem:[%s262 + $0x20] sm:$0xff]
                  %269 = vst [vmem:[%s263 + $0x10] sm:$0xff] %v268
                  %v270 = vld [vmem:[%s262 + $0x30] sm:$0xff]
                  %271 = vst [vmem:[%s263 + $0x18] sm:$0xff] %v270
                $region68: #{lstm_net_forward.1} parent=62 // loop_footer
                  %s261 = sadd.s32 1, %s257
                $region69: #{lstm_net_forward.1} parent=62 // loop_footer_branch
                  %256 = sbr.rel target = $region65
                $region70: #{lstm_net_forward.1} parent=62 // loop_exit
                  _
              $region63: #{lstm_net_forward.1} parent=47 // pred_fallthru
                _
              // Predicated region
              $region71: #{lstm_net_forward.1} parent=47 // pred_check
                _
              $region72: #{lstm_net_forward.1} parent=47 // pred_check_branch
                %273 = sbr.rel target = $region74
              $region73: #{lstm_net_forward.1} parent=47 // pred_region
                _
              $region74: #{lstm_net_forward.1} parent=47 // pred_fallthru
                _
            $region48: #{lstm_net_forward.1} parent=43 // pred_fallthru
              _
            // Predicated region
            $region49: #{lstm_net_forward.1} parent=43 // pred_check
              _
            $region50: #{lstm_net_forward.1} parent=43 // pred_check_branch
              %236 = sbr.rel target = $region52
            $region51: #{lstm_net_forward.1} parent=43 // pred_region
              loop: start=0, step=1, limit=1
              $region53: #{lstm_net_forward.1} parent=51 // loop_pre_header
                _
              $region54: #{lstm_net_forward.1} parent=51 // loop_header
                %s239 = sphi 0, %s243
                %p240 = scmp.ge.s32.totalorder %s239, 1
                %s244 = sphi %s230, %s230
                %s245 = sphi %s225, %s225
              $region55: #{lstm_net_forward.1} parent=51 // loop_header_branch
                %242 = sbr.rel (%p240) target = $region59
              $region56: #{lstm_net_forward.1} parent=51 // loop_body
                %v246 = vld [vmem:[%s244] sm:$0xff]
                %247 = vst [vmem:[%s245] sm:$0xff] %v246
                %v248 = vld [vmem:[%s244 + $0x10] sm:$0xff]
                %249 = vst [vmem:[%s245 + $0x8] sm:$0xff] %v248
                %v250 = vld [vmem:[%s244 + $0x20] sm:$0xff]
                %251 = vst [vmem:[%s245 + $0x10] sm:$0xff] %v250
                %v252 = vld [vmem:[%s244 + $0x30] sm:$0xff]
                %253 = vst [vmem:[%s245 + $0x18] sm:$0xff] %v252
              $region57: #{lstm_net_forward.1} parent=51 // loop_footer
                %s243 = sadd.s32 1, %s239
              $region58: #{lstm_net_forward.1} parent=51 // loop_footer_branch
                %238 = sbr.rel target = $region54
              $region59: #{lstm_net_forward.1} parent=51 // loop_exit
                _
            $region52: #{lstm_net_forward.1} parent=43 // pred_fallthru
              _
          $region44: #{lstm_net_forward.1} parent=39 // pred_fallthru
            _
          %274 = vnop
        $region40: #{lstm_net_forward.1} parent=35 // pred_fallthru
          _
      $region36: #{lstm_net_forward.1} parent=5 // pred_fallthru
        _
      %p275 = scmp.le.s32.totalorder 1, %s12
      %p276 = scmp.lt.s32.totalorder %s12, 5
      %p277 = pnand %p275, %p276
      %p278 = pneg %p277
      // Predicated region
      $region75: #{lstm_net_forward.1} parent=5 // pred_check
        _
      $region76: #{lstm_net_forward.1} parent=5 // pred_check_branch
        %280 = sbr.rel (%p277) target = $region78
      $region77: #{lstm_net_forward.1} parent=5 // pred_region
        %s281 = ssub.s32 %s12, 1
        %s282 = sand.u32 %s39, 1
        %s283 = sand.u32 %s39, 1
        %s284 = smul.addr %s283, 32
        %s285 = scalar_lea.vmem [#allocation5], %s284
        // Predicated region
        $region79: #{lstm_net_forward.1} parent=77 // pred_check
          %p286 = pneg %p52
        $region80: #{lstm_net_forward.1} parent=77 // pred_check_branch
          %288 = sbr.rel (%p286) target = $region82
        $region81: #{lstm_net_forward.1} parent=77 // pred_region
          _
        $region82: #{lstm_net_forward.1} parent=77 // pred_fallthru
          _
        %s289 = sand.u32 %s39, 1
        %s290 = sand.u32 %s39, 1
        %s291 = smul.addr %s290, 32
        %s292 = scalar_lea.vmem [#allocation5], %s291
        %p293 = pneg %p52
        %p294 = pneg %p49
        %p295 = pneg %p73
        %p296 = pneg %p70
        %p297 = pneg %p94
        %p298 = pneg %p91
        %p299 = pneg %p115
        %p300 = pneg %p112
        %p301 = pneg %p136
        %p302 = pneg %p133
        %p303 = pneg %p157
        %p304 = pneg %p154
        %p305 = pneg %p185
        %p306 = pneg %p182
        %s307 = sand.u32 %s172, 1
        %s308 = sand.u32 %s172, 1
        %s309 = smul.addr %s308, 32
        %s310 = scalar_lea.vmem [#allocation6], %s309
        %s311 = smul.u32 4, %s22
        %s312 = smul.u32 4, %s22
        %p313 = scmp.eq.s32.totalorder %s22, 0
        // Predicated region
        $region83: #{lstm_net_forward.1} parent=77 // pred_check
          %p314 = pneg %p313
        $region84: #{lstm_net_forward.1} parent=77 // pred_check_branch
          %316 = sbr.rel (%p314) target = $region86
        $region85: #{lstm_net_forward.1} parent=77 // pred_region
          %317 = vst [vmem:[#allocation3] sm:$0xff] 0.0
          %318 = vst [vmem:[#allocation4] sm:$0xff] 0.0
        $region86: #{lstm_net_forward.1} parent=77 // pred_fallthru
          _
        %v319 = vld [vmem:[%s285] sm:$0xff]
        %v320 = vld [vmem:[%s285 + $0x8] sm:$0xff]
        %v321 = vld [vmem:[%s285 + $0x10] sm:$0xff]
        %v322 = vld [vmem:[%s285 + $0x18] sm:$0xff]
        %v323 = vld [vmem:[%s2] sm:$0x1]
        %v324 = vld [vmem:[%s1] sm:$0x1]
        %326 = vset.pattern.permute.xlu0 0
        %327 = vperm.xlu0 %326, %v319
        %v328 = vpop.permute.xlu0 %327
        %331 = vset.pattern.permute.xlu0 0
        %332 = vperm.xlu0 %331, %v320
        %v333 = vpop.permute.xlu0 %332
        %336 = vset.pattern.permute.xlu0 0
        %337 = vperm.xlu0 %336, %v321
        %v338 = vpop.permute.xlu0 %337
        %341 = vset.pattern.permute.xlu0 0
        %342 = vperm.xlu0 %341, %v322
        %v343 = vpop.permute.xlu0 %342
        %v345 = vlaneseq
        %v346 = vshrl.u32 %v345, 7
        %v347 = vsub.s32 0, %v346
        %v348 = vrot.slane %v324, %v347
        %v349 = vmul.f32 %v328, %v348
        %v350 = vmul.f32 %v333, %v348
        %v351 = vmul.f32 %v338, %v348
        %v352 = vmul.f32 %v343, %v348
        %v354 = vlaneseq
        %v355 = vshrl.u32 %v354, 7
        %v356 = vsub.s32 0, %v355
        %v357 = vrot.slane %v323, %v356
        %v359 = vadd.f32 %v357, %v349
        %v360 = vadd.f32 %v357, %v350
        %v361 = vadd.f32 %v357, %v351
        %v362 = vadd.f32 %v357, %v352
        %v363 = vld [vmem:[%s1 + $0x1] sm:$0x1]
        %364 = vset.pattern.permute.xlu0 1
        %365 = vperm.xlu0 %364, %v319
        %v366 = vpop.permute.xlu0 %365
        %368 = vset.pattern.permute.xlu0 1
        %369 = vperm.xlu0 %368, %v320
        %v370 = vpop.permute.xlu0 %369
        %372 = vset.pattern.permute.xlu0 1
        %373 = vperm.xlu0 %372, %v321
        %v374 = vpop.permute.xlu0 %373
        %376 = vset.pattern.permute.xlu0 1
        %377 = vperm.xlu0 %376, %v322
        %v378 = vpop.permute.xlu0 %377
        %v380 = vlaneseq
        %v381 = vshrl.u32 %v380, 7
        %v382 = vsub.s32 0, %v381
        %v383 = vrot.slane %v363, %v382
        %v384 = vmul.f32 %v366, %v383
        %v385 = vmul.f32 %v370, %v383
        %v386 = vmul.f32 %v374, %v383
        %v387 = vmul.f32 %v378, %v383
        %v388 = vadd.f32 %v359, %v384
        %v389 = vadd.f32 %v360, %v385
        %v390 = vadd.f32 %v361, %v386
        %v391 = vadd.f32 %v362, %v387
        %v392 = vmax.f32 %v388, 0.0
        %v393 = vmax.f32 %v389, 0.0
        %v394 = vmax.f32 %v390, 0.0
        %v395 = vmax.f32 %v391, 0.0
        %v396 = vld [vmem:[%s3] sm:$0xff]
        %v397 = vld [vmem:[%s3 + $0x8] sm:$0xff]
        %v398 = vld [vmem:[%s3 + $0x10] sm:$0xff]
        %v399 = vld [vmem:[%s3 + $0x18] sm:$0xff]
        %v400 = vld [vmem:[%s3 + $0x20] sm:$0xff]
        %v401 = vld [vmem:[%s3 + $0x28] sm:$0xff]
        %v402 = vld [vmem:[%s3 + $0x30] sm:$0xff]
        %v403 = vld [vmem:[%s3 + $0x38] sm:$0xff]
        %v404 = vld [vmem:[%s3 + $0x40] sm:$0xff]
        %v405 = vld [vmem:[%s3 + $0x48] sm:$0xff]
        %v406 = vld [vmem:[%s3 + $0x50] sm:$0xff]
        %v407 = vld [vmem:[%s3 + $0x58] sm:$0xff]
        %v408 = vld [vmem:[%s3 + $0x60] sm:$0xff]
        %v409 = vld [vmem:[%s3 + $0x68] sm:$0xff]
        %v410 = vld [vmem:[%s3 + $0x70] sm:$0xff]
        %v411 = vld [vmem:[%s3 + $0x78] sm:$0xff]
        %v412 = vld [vmem:[%s3 + $0x80] sm:$0xff]
        %v413 = vld [vmem:[%s3 + $0x88] sm:$0xff]
        %v414 = vld [vmem:[%s3 + $0x90] sm:$0xff]
        %v415 = vld [vmem:[%s3 + $0x98] sm:$0xff]
        %v416 = vld [vmem:[%s3 + $0xa0] sm:$0xff]
        %v417 = vld [vmem:[%s3 + $0xa8] sm:$0xff]
        %v418 = vld [vmem:[%s3 + $0xb0] sm:$0xff]
        %v419 = vld [vmem:[%s3 + $0xb8] sm:$0xff]
        %v420 = vld [vmem:[%s3 + $0xc0] sm:$0xff]
        %v421 = vld [vmem:[%s3 + $0xc8] sm:$0xff]
        %v422 = vld [vmem:[%s3 + $0xd0] sm:$0xff]
        %v423 = vld [vmem:[%s3 + $0xd8] sm:$0xff]
        %v424 = vld [vmem:[%s3 + $0xe0] sm:$0xff]
        %v425 = vld [vmem:[%s3 + $0xe8] sm:$0xff]
        %v426 = vld [vmem:[%s3 + $0xf0] sm:$0xff]
        %v427 = vld [vmem:[%s3 + $0xf8] sm:$0xff]
        %v428 = vld [vmem:[%s5] sm:$0xf]
        %v430 = vlaneseq
        %v431 = vshrl.u32 %v430, 7
        %v432 = vsub.s32 0, %v431
        %v433 = vrot.slane %v428, %v432
        %v434 = vlaneseq
        %v435 = vshrl.u32 %v434, 7
        %v436 = vsub.s32 1, %v435
        %v437 = vrot.slane %v428, %v436
        %v438 = vlaneseq
        %v439 = vshrl.u32 %v438, 7
        %v440 = vsub.s32 2, %v439
        %v441 = vrot.slane %v428, %v440
        %v442 = vlaneseq
        %v443 = vshrl.u32 %v442, 7
        %v444 = vsub.s32 3, %v443
        %v445 = vrot.slane %v428, %v444
        %vm450 = vcmask 523264
        %v452 = vsel %vm450, %v392, 0
        %v455 = vsel %vm450, %v393, 0
        %v458 = vsel %vm450, %v394, 0
        %v461 = vsel %vm450, %v395, 0
        %463 = vmatprep.subr.mxu0 %v397
        %464 = vmatpush1.msra.mxu0 %v396
        %465 = vmatprep.subr.mxu0 %v401
        %466 = vmatpush1.msra.mxu0 %v400
        %467 = vmatprep.subr.mxu0 %v405
        %468 = vmatpush1.msra.mxu0 %v404
        %469 = vmatprep.subr.mxu0 %v409
        %470 = vmatpush1.msra.mxu0 %v408
        %471 = vmatprep.subr.mxu0 %v413
        %472 = vmatpush1.msra.mxu0 %v412
        %473 = vmatprep.subr.mxu0 %v417
        %474 = vmatpush1.msra.mxu0 %v416
        %475 = vmatprep.subr.mxu0 %v421
        %476 = vmatpush1.msra.mxu0 %v420
        %477 = vmatprep.subr.mxu0 %v425
        %478 = vmatpush1.msra.mxu0 %v424
        %479 = vmatprep.subr.mxu0 0.0
        %480 = vmatpush1.msra.mxu0 0.0
        %481 = vmatprep.subr.mxu0 0.0
        %482 = vmatpush1.msra.mxu0 0.0
        %483 = vmatprep.subr.mxu0 0.0
        %484 = vmatpush1.msra.mxu0 0.0
        %485 = vmatprep.subr.mxu0 0.0
        %486 = vmatpush1.msra.mxu0 0.0
        %487 = vmatprep.subr.mxu0 0.0
        %488 = vmatpush1.msra.mxu0 0.0
        %489 = vmatprep.subr.mxu0 0.0
        %490 = vmatpush1.msra.mxu0 0.0
        %491 = vmatprep.subr.mxu0 0.0
        %492 = vmatpush1.msra.mxu0 0.0
        %493 = vmatprep.subr.mxu0 0.0
        %494 = vmatpush1.msra.mxu0 0.0
        %495 = vmatprep.subr.mxu0 0.0
        %496 = vmatpush1.msra.mxu0 0.0
        %497 = vmatprep.subr.mxu0 0.0
        %498 = vmatpush1.msra.mxu0 0.0
        %499 = vmatprep.subr.mxu0 0.0
        %500 = vmatpush1.msra.mxu0 0.0
        %501 = vmatprep.subr.mxu0 0.0
        %502 = vmatpush1.msra.mxu0 0.0
        %503 = vmatprep.subr.mxu0 0.0
        %504 = vmatpush1.msra.mxu0 0.0
        %505 = vmatprep.subr.mxu0 0.0
        %506 = vmatpush1.msra.mxu0 0.0
        %507 = vmatprep.subr.mxu0 0.0
        %508 = vmatpush1.msra.mxu0 0.0
        %509 = vmatprep.subr.mxu0 0.0
        %510 = vmatpush1.msra.mxu0 0.0
        %511 = vmatprep.subr.mxu0 0.0
        %512 = vmatpush1.msra.mxu0 0.0
        %513 = vmatprep.subr.mxu0 0.0
        %514 = vmatpush1.msra.mxu0 0.0
        %515 = vmatprep.subr.mxu0 0.0
        %516 = vmatpush1.msra.mxu0 0.0
        %517 = vmatprep.subr.mxu0 0.0
        %518 = vmatpush1.msra.mxu0 0.0
        %519 = vmatprep.subr.mxu0 0.0
        %520 = vmatpush1.msra.mxu0 0.0
        %521 = vmatprep.subr.mxu0 0.0
        %522 = vmatpush1.msra.mxu0 0.0
        %523 = vmatprep.subr.mxu0 0.0
        %524 = vmatpush1.msra.mxu0 0.0
        %525 = vmatprep.subr.mxu0 0.0
        %526 = vmatpush1.msra.mxu0 0.0
        %527 = vmatprep.mubr.f32.mxu0 0.0
        %528 = vmatmul.mubr.f32.gmra.mrb[0].mxu0 %v452
        %v529 = vpop.f32.mrb[0].mxu0
        %v530 = vadd.f32 %v433, %v529
        %v531 = vpop.f32.mrb[0].mxu0
        %v532 = vadd.f32 %v437, %v531
        %533 = vmatprep.mubr.f32.mxu0 0.0
        %534 = vmatmul.mubr.f32.gmra.mrb[0].mxu0 %v455
        %v535 = vpop.f32.mrb[0].mxu0
        %v536 = vadd.f32 %v433, %v535
        %v537 = vpop.f32.mrb[0].mxu0
        %v538 = vadd.f32 %v437, %v537
        %539 = vmatprep.mubr.f32.mxu0 0.0
        %540 = vmatmul.mubr.f32.gmra.mrb[0].mxu0 %v458
        %v541 = vpop.f32.mrb[0].mxu0
        %v542 = vadd.f32 %v433, %v541
        %v543 = vpop.f32.mrb[0].mxu0
        %v544 = vadd.f32 %v437, %v543
        %545 = vmatprep.mubr.f32.mxu0 0.0
        %546 = vmatmul.mubr.f32.gmra.mrb[0].mxu0 %v461
        %v547 = vpop.f32.mrb[0].mxu0
        %v548 = vadd.f32 %v433, %v547
        %v549 = vpop.f32.mrb[0].mxu0
        %v550 = vadd.f32 %v437, %v549
        %551 = vdwg.mxu0
        %552 = vmatprep.subr.mxu0 %v399
        %553 = vmatpush1.msra.mxu0 %v398
        %554 = vmatprep.subr.mxu0 %v403
        %555 = vmatpush1.msra.mxu0 %v402
        %556 = vmatprep.subr.mxu0 %v407
        %557 = vmatpush1.msra.mxu0 %v406
        %558 = vmatprep.subr.mxu0 %v411
        %559 = vmatpush1.msra.mxu0 %v410
        %560 = vmatprep.subr.mxu0 %v415
        %561 = vmatpush1.msra.mxu0 %v414
        %562 = vmatprep.subr.mxu0 %v419
        %563 = vmatpush1.msra.mxu0 %v418
        %564 = vmatprep.subr.mxu0 %v423
        %565 = vmatpush1.msra.mxu0 %v422
        %566 = vmatprep.subr.mxu0 %v427
        %567 = vmatpush1.msra.mxu0 %v426
        %568 = vmatprep.subr.mxu0 0.0
        %569 = vmatpush1.msra.mxu0 0.0
        %570 = vmatprep.subr.mxu0 0.0
        %571 = vmatpush1.msra.mxu0 0.0
        %572 = vmatprep.subr.mxu0 0.0
        %573 = vmatpush1.msra.mxu0 0.0
        %574 = vmatprep.subr.mxu0 0.0
        %575 = vmatpush1.msra.mxu0 0.0
        %576 = vmatprep.subr.mxu0 0.0
        %577 = vmatpush1.msra.mxu0 0.0
        %578 = vmatprep.subr.mxu0 0.0
        %579 = vmatpush1.msra.mxu0 0.0
        %580 = vmatprep.subr.mxu0 0.0
        %581 = vmatpush1.msra.mxu0 0.0
        %582 = vmatprep.subr.mxu0 0.0
        %583 = vmatpush1.msra.mxu0 0.0
        %584 = vmatprep.subr.mxu0 0.0
        %585 = vmatpush1.msra.mxu0 0.0
        %586 = vmatprep.subr.mxu0 0.0
        %587 = vmatpush1.msra.mxu0 0.0
        %588 = vmatprep.subr.mxu0 0.0
        %589 = vmatpush1.msra.mxu0 0.0
        %590 = vmatprep.subr.mxu0 0.0
        %591 = vmatpush1.msra.mxu0 0.0
        %592 = vmatprep.subr.mxu0 0.0
        %593 = vmatpush1.msra.mxu0 0.0
        %594 = vmatprep.subr.mxu0 0.0
        %595 = vmatpush1.msra.mxu0 0.0
        %596 = vmatprep.subr.mxu0 0.0
        %597 = vmatpush1.msra.mxu0 0.0
        %598 = vmatprep.subr.mxu0 0.0
        %599 = vmatpush1.msra.mxu0 0.0
        %600 = vmatprep.subr.mxu0 0.0
        %601 = vmatpush1.msra.mxu0 0.0
        %602 = vmatprep.subr.mxu0 0.0
        %603 = vmatpush1.msra.mxu0 0.0
        %604 = vmatprep.subr.mxu0 0.0
        %605 = vmatpush1.msra.mxu0 0.0
        %606 = vmatprep.subr.mxu0 0.0
        %607 = vmatpush1.msra.mxu0 0.0
        %608 = vmatprep.subr.mxu0 0.0
        %609 = vmatpush1.msra.mxu0 0.0
        %610 = vmatprep.subr.mxu0 0.0
        %611 = vmatpush1.msra.mxu0 0.0
        %612 = vmatprep.subr.mxu0 0.0
        %613 = vmatpush1.msra.mxu0 0.0
        %614 = vmatprep.subr.mxu0 0.0
        %615 = vmatpush1.msra.mxu0 0.0
        %616 = vmatprep.mubr.f32.mxu0 0.0
        %617 = vmatmul.mubr.f32.gmra.mrb[0].mxu0 %v452
        %v618 = vpop.f32.mrb[0].mxu0
        %v619 = vadd.f32 %v441, %v618
        %v620 = vpop.f32.mrb[0].mxu0
        %v621 = vadd.f32 %v445, %v620
        %622 = vmatprep.mubr.f32.mxu0 0.0
        %623 = vmatmul.mubr.f32.gmra.mrb[0].mxu0 %v455
        %v624 = vpop.f32.mrb[0].mxu0
        %v625 = vadd.f32 %v441, %v624
        %v626 = vpop.f32.mrb[0].mxu0
        %v627 = vadd.f32 %v445, %v626
        %628 = vmatprep.mubr.f32.mxu0 0.0
        %629 = vmatmul.mubr.f32.gmra.mrb[0].mxu0 %v458
        %v630 = vpop.f32.mrb[0].mxu0
        %v631 = vadd.f32 %v441, %v630
        %v632 = vpop.f32.mrb[0].mxu0
        %v633 = vadd.f32 %v445, %v632
        %634 = vmatprep.mubr.f32.mxu0 0.0
        %635 = vmatmul.mubr.f32.gmra.mrb[0].mxu0 %v461
        %v636 = vpop.f32.mrb[0].mxu0
        %v637 = vadd.f32 %v441, %v636
        %v638 = vpop.f32.mrb[0].mxu0
        %v639 = vadd.f32 %v445, %v638
        %640 = vdwg.mxu0
        %641 = vst [vmem:[#allocation2] sm:$0xff] %v530
        %642 = vst [vmem:[#allocation2 + $0x8] sm:$0xff] %v532
        %643 = vst [vmem:[#allocation2 + $0x10] sm:$0xff] %v619
        %644 = vst [vmem:[#allocation2 + $0x18] sm:$0xff] %v621
        %645 = vst [vmem:[#allocation2 + $0x20] sm:$0xff] %v536
        %646 = vst [vmem:[#allocation2 + $0x28] sm:$0xff] %v538
        %647 = vst [vmem:[#allocation2 + $0x30] sm:$0xff] %v625
        %648 = vst [vmem:[#allocation2 + $0x38] sm:$0xff] %v627
        %649 = vst [vmem:[#allocation2 + $0x40] sm:$0xff] %v542
        %650 = vst [vmem:[#allocation2 + $0x48] sm:$0xff] %v544
        %651 = vst [vmem:[#allocation2 + $0x50] sm:$0xff] %v631
        %652 = vst [vmem:[#allocation2 + $0x58] sm:$0xff] %v633
        %653 = vst [vmem:[#allocation2 + $0x60] sm:$0xff] %v548
        %654 = vst [vmem:[#allocation2 + $0x68] sm:$0xff] %v550
        %655 = vst [vmem:[#allocation2 + $0x70] sm:$0xff] %v637
        %656 = vst [vmem:[#allocation2 + $0x78] sm:$0xff] %v639
        %v657 = vld [vmem:[#allocation3] sm:$0xff]
        %v658 = vld [vmem:[#allocation4] sm:$0xff]
        %s659 = smul.u32 0, 4
        %s660 = smul.addr %s659, 8
        %s661 = scalar_lea.vmem [#allocation2], %s660
        %v662 = vld [vmem:[%s661] sm:$0xff]
        %v663 = vld [vmem:[%s661 + $0x8] sm:$0xff]
        %v664 = vld [vmem:[%s661 + $0x10] sm:$0xff]
        %v665 = vld [vmem:[%s661 + $0x18] sm:$0xff]
        %v666 = vld [vmem:[%s4] sm:$0xff]
        %v667 = vld [vmem:[%s4 + $0x8] sm:$0xff]
        %v668 = vld [vmem:[%s4 + $0x10] sm:$0xff]
        %v669 = vld [vmem:[%s4 + $0x18] sm:$0xff]
        %v670 = vld [vmem:[%s4 + $0x20] sm:$0xff]
        %v671 = vld [vmem:[%s4 + $0x28] sm:$0xff]
        %v672 = vld [vmem:[%s4 + $0x30] sm:$0xff]
        %v673 = vld [vmem:[%s4 + $0x38] sm:$0xff]
        %v674 = vld [vmem:[%s4 + $0x40] sm:$0xff]
        %v675 = vld [vmem:[%s4 + $0x48] sm:$0xff]
        %v676 = vld [vmem:[%s4 + $0x50] sm:$0xff]
        %v677 = vld [vmem:[%s4 + $0x58] sm:$0xff]
        %v678 = vld [vmem:[%s4 + $0x60] sm:$0xff]
        %v679 = vld [vmem:[%s4 + $0x68] sm:$0xff]
        %v680 = vld [vmem:[%s4 + $0x70] sm:$0xff]
        %v681 = vld [vmem:[%s4 + $0x78] sm:$0xff]
        %v682 = vld [vmem:[%s4 + $0x80] sm:$0xff]
        %v683 = vld [vmem:[%s4 + $0x88] sm:$0xff]
        %v684 = vld [vmem:[%s4 + $0x90] sm:$0xff]
        %v685 = vld [vmem:[%s4 + $0x98] sm:$0xff]
        %v686 = vld [vmem:[%s4 + $0xa0] sm:$0xff]
        %v687 = vld [vmem:[%s4 + $0xa8] sm:$0xff]
        %v688 = vld [vmem:[%s4 + $0xb0] sm:$0xff]
        %v689 = vld [vmem:[%s4 + $0xb8] sm:$0xff]
        %v690 = vld [vmem:[%s4 + $0xc0] sm:$0xff]
        %v691 = vld [vmem:[%s4 + $0xc8] sm:$0xff]
        %v692 = vld [vmem:[%s4 + $0xd0] sm:$0xff]
        %v693 = vld [vmem:[%s4 + $0xd8] sm:$0xff]
        %v694 = vld [vmem:[%s4 + $0xe0] sm:$0xff]
        %v695 = vld [vmem:[%s4 + $0xe8] sm:$0xff]
        %v696 = vld [vmem:[%s4 + $0xf0] sm:$0xff]
        %v697 = vld [vmem:[%s4 + $0xf8] sm:$0xff]
        %v698 = vld [vmem:[%s4 + $0x100] sm:$0xff]
        %v699 = vld [vmem:[%s4 + $0x108] sm:$0xff]
        %v700 = vld [vmem:[%s4 + $0x110] sm:$0xff]
        %v701 = vld [vmem:[%s4 + $0x118] sm:$0xff]
        %v702 = vld [vmem:[%s4 + $0x120] sm:$0xff]
        %v703 = vld [vmem:[%s4 + $0x128] sm:$0xff]
        %v704 = vld [vmem:[%s4 + $0x130] sm:$0xff]
        %v705 = vld [vmem:[%s4 + $0x138] sm:$0xff]
        %v706 = vld [vmem:[%s4 + $0x140] sm:$0xff]
        %v707 = vld [vmem:[%s4 + $0x148] sm:$0xff]
        %v708 = vld [vmem:[%s4 + $0x150] sm:$0xff]
        %v709 = vld [vmem:[%s4 + $0x158] sm:$0xff]
        %v710 = vld [vmem:[%s4 + $0x160] sm:$0xff]
        %v711 = vld [vmem:[%s4 + $0x168] sm:$0xff]
        %v712 = vld [vmem:[%s4 + $0x170] sm:$0xff]
        %v713 = vld [vmem:[%s4 + $0x178] sm:$0xff]
        %v714 = vld [vmem:[%s4 + $0x180] sm:$0xff]
        %v715 = vld [vmem:[%s4 + $0x188] sm:$0xff]
        %v716 = vld [vmem:[%s4 + $0x190] sm:$0xff]
        %v717 = vld [vmem:[%s4 + $0x198] sm:$0xff]
        %v718 = vld [vmem:[%s4 + $0x1a0] sm:$0xff]
        %v719 = vld [vmem:[%s4 + $0x1a8] sm:$0xff]
        %v720 = vld [vmem:[%s4 + $0x1b0] sm:$0xff]
        %v721 = vld [vmem:[%s4 + $0x1b8] sm:$0xff]
        %v722 = vld [vmem:[%s4 + $0x1c0] sm:$0xff]
        %v723 = vld [vmem:[%s4 + $0x1c8] sm:$0xff]
        %v724 = vld [vmem:[%s4 + $0x1d0] sm:$0xff]
        %v725 = vld [vmem:[%s4 + $0x1d8] sm:$0xff]
        %v726 = vld [vmem:[%s4 + $0x1e0] sm:$0xff]
        %v727 = vld [vmem:[%s4 + $0x1e8] sm:$0xff]
        %v728 = vld [vmem:[%s4 + $0x1f0] sm:$0xff]
        %v729 = vld [vmem:[%s4 + $0x1f8] sm:$0xff]
        %730 = vmatprep.subr.mxu0 %v667
        %731 = vmatpush1.msra.mxu0 %v666
        %732 = vmatprep.subr.mxu0 %v671
        %733 = vmatpush1.msra.mxu0 %v670
        %734 = vmatprep.subr.mxu0 %v675
        %735 = vmatpush1.msra.mxu0 %v674
        %736 = vmatprep.subr.mxu0 %v679
        %737 = vmatpush1.msra.mxu0 %v678
        %738 = vmatprep.subr.mxu0 %v683
        %739 = vmatpush1.msra.mxu0 %v682
        %740 = vmatprep.subr.mxu0 %v687
        %741 = vmatpush1.msra.mxu0 %v686
        %742 = vmatprep.subr.mxu0 %v691
        %743 = vmatpush1.msra.mxu0 %v690
        %744 = vmatprep.subr.mxu0 %v695
        %745 = vmatpush1.msra.mxu0 %v694
        %746 = vmatprep.subr.mxu0 %v699
        %747 = vmatpush1.msra.mxu0 %v698
        %748 = vmatprep.subr.mxu0 %v703
        %749 = vmatpush1.msra.mxu0 %v702
        %750 = vmatprep.subr.mxu0 %v707
        %751 = vmatpush1.msra.mxu0 %v706
        %752 = vmatprep.subr.mxu0 %v711
        %753 = vmatpush1.msra.mxu0 %v710
        %754 = vmatprep.subr.mxu0 %v715
        %755 = vmatpush1.msra.mxu0 %v714
        %756 = vmatprep.subr.mxu0 %v719
        %757 = vmatpush1.msra.mxu0 %v718
        %758 = vmatprep.subr.mxu0 %v723
        %759 = vmatpush1.msra.mxu0 %v722
        %760 = vmatprep.subr.mxu0 %v727
        %761 = vmatpush1.msra.mxu0 %v726
        %762 = vmatprep.subr.mxu0 0.0
        %763 = vmatpush1.msra.mxu0 0.0
        %764 = vmatprep.subr.mxu0 0.0
        %765 = vmatpush1.msra.mxu0 0.0
        %766 = vmatprep.subr.mxu0 0.0
        %767 = vmatpush1.msra.mxu0 0.0
        %768 = vmatprep.subr.mxu0 0.0
        %769 = vmatpush1.msra.mxu0 0.0
        %770 = vmatprep.subr.mxu0 0.0
        %771 = vmatpush1.msra.mxu0 0.0
        %772 = vmatprep.subr.mxu0 0.0
        %773 = vmatpush1.msra.mxu0 0.0
        %774 = vmatprep.subr.mxu0 0.0
        %775 = vmatpush1.msra.mxu0 0.0
        %776 = vmatprep.subr.mxu0 0.0
        %777 = vmatpush1.msra.mxu0 0.0
        %778 = vmatprep.subr.mxu0 0.0
        %779 = vmatpush1.msra.mxu0 0.0
        %780 = vmatprep.subr.mxu0 0.0
        %781 = vmatpush1.msra.mxu0 0.0
        %782 = vmatprep.subr.mxu0 0.0
        %783 = vmatpush1.msra.mxu0 0.0
        %784 = vmatprep.subr.mxu0 0.0
        %785 = vmatpush1.msra.mxu0 0.0
        %786 = vmatprep.subr.mxu0 0.0
        %787 = vmatpush1.msra.mxu0 0.0
        %788 = vmatprep.subr.mxu0 0.0
        %789 = vmatpush1.msra.mxu0 0.0
        %790 = vmatprep.subr.mxu0 0.0
        %791 = vmatpush1.msra.mxu0 0.0
        %792 = vmatprep.subr.mxu0 0.0
        %793 = vmatpush1.msra.mxu0 0.0
        %794 = vmatprep.mubr.f32.mxu0 0.0
        %795 = vmatmul.mubr.f32.gmra.mrb[0].mxu0 %v657
        %v796 = vpop.f32.mrb[0].mxu0
        %v797 = vadd.f32 0.0, %v796
        %v798 = vpop.f32.mrb[0].mxu0
        %v799 = vadd.f32 0.0, %v798
        %800 = vdwg.mxu0
        %801 = vmatprep.subr.mxu0 %v669
        %802 = vmatpush1.msra.mxu0 %v668
        %803 = vmatprep.subr.mxu0 %v673
        %804 = vmatpush1.msra.mxu0 %v672
        %805 = vmatprep.subr.mxu0 %v677
        %806 = vmatpush1.msra.mxu0 %v676
        %807 = vmatprep.subr.mxu0 %v681
        %808 = vmatpush1.msra.mxu0 %v680
        %809 = vmatprep.subr.mxu0 %v685
        %810 = vmatpush1.msra.mxu0 %v684
        %811 = vmatprep.subr.mxu0 %v689
        %812 = vmatpush1.msra.mxu0 %v688
        %813 = vmatprep.subr.mxu0 %v693
        %814 = vmatpush1.msra.mxu0 %v692
        %815 = vmatprep.subr.mxu0 %v697
        %816 = vmatpush1.msra.mxu0 %v696
        %817 = vmatprep.subr.mxu0 %v701
        %818 = vmatpush1.msra.mxu0 %v700
        %819 = vmatprep.subr.mxu0 %v705
        %820 = vmatpush1.msra.mxu0 %v704
        %821 = vmatprep.subr.mxu0 %v709
        %822 = vmatpush1.msra.mxu0 %v708
        %823 = vmatprep.subr.mxu0 %v713
        %824 = vmatpush1.msra.mxu0 %v712
        %825 = vmatprep.subr.mxu0 %v717
        %826 = vmatpush1.msra.mxu0 %v716
        %827 = vmatprep.subr.mxu0 %v721
        %828 = vmatpush1.msra.mxu0 %v720
        %829 = vmatprep.subr.mxu0 %v725
        %830 = vmatpush1.msra.mxu0 %v724
        %831 = vmatprep.subr.mxu0 %v729
        %832 = vmatpush1.msra.mxu0 %v728
        %833 = vmatprep.subr.mxu0 0.0
        %834 = vmatpush1.msra.mxu0 0.0
        %835 = vmatprep.subr.mxu0 0.0
        %836 = vmatpush1.msra.mxu0 0.0
        %837 = vmatprep.subr.mxu0 0.0
        %838 = vmatpush1.msra.mxu0 0.0
        %839 = vmatprep.subr.mxu0 0.0
        %840 = vmatpush1.msra.mxu0 0.0
        %841 = vmatprep.subr.mxu0 0.0
        %842 = vmatpush1.msra.mxu0 0.0
        %843 = vmatprep.subr.mxu0 0.0
        %844 = vmatpush1.msra.mxu0 0.0
        %845 = vmatprep.subr.mxu0 0.0
        %846 = vmatpush1.msra.mxu0 0.0
        %847 = vmatprep.subr.mxu0 0.0
        %848 = vmatpush1.msra.mxu0 0.0
        %849 = vmatprep.subr.mxu0 0.0
        %850 = vmatpush1.msra.mxu0 0.0
        %851 = vmatprep.subr.mxu0 0.0
        %852 = vmatpush1.msra.mxu0 0.0
        %853 = vmatprep.subr.mxu0 0.0
        %854 = vmatpush1.msra.mxu0 0.0
        %855 = vmatprep.subr.mxu0 0.0
        %856 = vmatpush1.msra.mxu0 0.0
        %857 = vmatprep.subr.mxu0 0.0
        %858 = vmatpush1.msra.mxu0 0.0
        %859 = vmatprep.subr.mxu0 0.0
        %860 = vmatpush1.msra.mxu0 0.0
        %861 = vmatprep.subr.mxu0 0.0
        %862 = vmatpush1.msra.mxu0 0.0
        %863 = vmatprep.subr.mxu0 0.0
        %864 = vmatpush1.msra.mxu0 0.0
        %865 = vmatprep.mubr.f32.mxu0 0.0
        %866 = vmatmul.mubr.f32.gmra.mrb[0].mxu0 %v657
        %v867 = vpop.f32.mrb[0].mxu0
        %v868 = vadd.f32 0.0, %v867
        %v869 = vpop.f32.mrb[0].mxu0
        %v870 = vadd.f32 0.0, %v869
        %871 = vdwg.mxu0
        %v872 = vadd.f32 %v662, %v797
        %v873 = vadd.f32 %v663, %v799
        %v874 = vadd.f32 %v664, %v868
        %v875 = vadd.f32 %v665, %v870
        %v876 = vxor.u32 %v872, 2147483648
        %v877 = vxor.u32 %v873, 2147483648
        %v878 = vxor.u32 %v874, 2147483648
        %v879 = vmul.f32 %v876, 1.442695
        %v880 = vpow.pop %v879
        %v881 = vmul.f32 %v877, 1.442695
        %v882 = vpow.pop %v881
        %v883 = vmul.f32 %v878, 1.442695
        %v884 = vpow.pop %v883
        %v885 = vadd.f32 %v880, 1.0
        %v886 = vadd.f32 %v882, 1.0
        %v887 = vadd.f32 %v884, 1.0
        %v888 = vrcp.pop %v885
        %v889 = vmul.f32 1.0, %v888
        %v890 = vrcp.pop %v886
        %v891 = vmul.f32 1.0, %v890
        %v892 = vrcp.pop %v887
        %v893 = vmul.f32 1.0, %v892
        %v894 = vtanh.pop %v875
        %v895 = vmul.f32 %v891, %v658
        %v896 = vmul.f32 %v889, %v894
        %v897 = vadd.f32 %v895, %v896
        %v898 = vtanh.pop %v897
        %v899 = vmul.f32 %v893, %v898
        %900 = vst [vmem:[%s310] sm:$0xff] %v899
        %s901 = smul.u32 1, 4
        %s902 = smul.addr %s901, 8
        %s903 = scalar_lea.vmem [#allocation2], %s902
        %v904 = vld [vmem:[%s903] sm:$0xff]
        %v905 = vld [vmem:[%s903 + $0x8] sm:$0xff]
        %v906 = vld [vmem:[%s903 + $0x10] sm:$0xff]
        %v907 = vld [vmem:[%s903 + $0x18] sm:$0xff]
        %v908 = vld [vmem:[%s4] sm:$0xff]
        %v909 = vld [vmem:[%s4 + $0x8] sm:$0xff]
        %v910 = vld [vmem:[%s4 + $0x10] sm:$0xff]
        %v911 = vld [vmem:[%s4 + $0x18] sm:$0xff]
        %v912 = vld [vmem:[%s4 + $0x20] sm:$0xff]
        %v913 = vld [vmem:[%s4 + $0x28] sm:$0xff]
        %v914 = vld [vmem:[%s4 + $0x30] sm:$0xff]
        %v915 = vld [vmem:[%s4 + $0x38] sm:$0xff]
        %v916 = vld [vmem:[%s4 + $0x40] sm:$0xff]
        %v917 = vld [vmem:[%s4 + $0x48] sm:$0xff]
        %v918 = vld [vmem:[%s4 + $0x50] sm:$0xff]
        %v919 = vld [vmem:[%s4 + $0x58] sm:$0xff]
        %v920 = vld [vmem:[%s4 + $0x60] sm:$0xff]
        %v921 = vld [vmem:[%s4 + $0x68] sm:$0xff]
        %v922 = vld [vmem:[%s4 + $0x70] sm:$0xff]
        %v923 = vld [vmem:[%s4 + $0x78] sm:$0xff]
        %v924 = vld [vmem:[%s4 + $0x80] sm:$0xff]
        %v925 = vld [vmem:[%s4 + $0x88] sm:$0xff]
        %v926 = vld [vmem:[%s4 + $0x90] sm:$0xff]
        %v927 = vld [vmem:[%s4 + $0x98] sm:$0xff]
        %v928 = vld [vmem:[%s4 + $0xa0] sm:$0xff]
        %v929 = vld [vmem:[%s4 + $0xa8] sm:$0xff]
        %v930 = vld [vmem:[%s4 + $0xb0] sm:$0xff]
        %v931 = vld [vmem:[%s4 + $0xb8] sm:$0xff]
        %v932 = vld [vmem:[%s4 + $0xc0] sm:$0xff]
        %v933 = vld [vmem:[%s4 + $0xc8] sm:$0xff]
        %v934 = vld [vmem:[%s4 + $0xd0] sm:$0xff]
        %v935 = vld [vmem:[%s4 + $0xd8] sm:$0xff]
        %v936 = vld [vmem:[%s4 + $0xe0] sm:$0xff]
        %v937 = vld [vmem:[%s4 + $0xe8] sm:$0xff]
        %v938 = vld [vmem:[%s4 + $0xf0] sm:$0xff]
        %v939 = vld [vmem:[%s4 + $0xf8] sm:$0xff]
        %v940 = vld [vmem:[%s4 + $0x100] sm:$0xff]
        %v941 = vld [vmem:[%s4 + $0x108] sm:$0xff]
        %v942 = vld [vmem:[%s4 + $0x110] sm:$0xff]
        %v943 = vld [vmem:[%s4 + $0x118] sm:$0xff]
        %v944 = vld [vmem:[%s4 + $0x120] sm:$0xff]
        %v945 = vld [vmem:[%s4 + $0x128] sm:$0xff]
        %v946 = vld [vmem:[%s4 + $0x130] sm:$0xff]
        %v947 = vld [vmem:[%s4 + $0x138] sm:$0xff]
        %v948 = vld [vmem:[%s4 + $0x140] sm:$0xff]
        %v949 = vld [vmem:[%s4 + $0x148] sm:$0xff]
        %v950 = vld [vmem:[%s4 + $0x150] sm:$0xff]
        %v951 = vld [vmem:[%s4 + $0x158] sm:$0xff]
        %v952 = vld [vmem:[%s4 + $0x160] sm:$0xff]
        %v953 = vld [vmem:[%s4 + $0x168] sm:$0xff]
        %v954 = vld [vmem:[%s4 + $0x170] sm:$0xff]
        %v955 = vld [vmem:[%s4 + $0x178] sm:$0xff]
        %v956 = vld [vmem:[%s4 + $0x180] sm:$0xff]
        %v957 = vld [vmem:[%s4 + $0x188] sm:$0xff]
        %v958 = vld [vmem:[%s4 + $0x190] sm:$0xff]
        %v959 = vld [vmem:[%s4 + $0x198] sm:$0xff]
        %v960 = vld [vmem:[%s4 + $0x1a0] sm:$0xff]
        %v961 = vld [vmem:[%s4 + $0x1a8] sm:$0xff]
        %v962 = vld [vmem:[%s4 + $0x1b0] sm:$0xff]
        %v963 = vld [vmem:[%s4 + $0x1b8] sm:$0xff]
        %v964 = vld [vmem:[%s4 + $0x1c0] sm:$0xff]
        %v965 = vld [vmem:[%s4 + $0x1c8] sm:$0xff]
        %v966 = vld [vmem:[%s4 + $0x1d0] sm:$0xff]
        %v967 = vld [vmem:[%s4 + $0x1d8] sm:$0xff]
        %v968 = vld [vmem:[%s4 + $0x1e0] sm:$0xff]
        %v969 = vld [vmem:[%s4 + $0x1e8] sm:$0xff]
        %v970 = vld [vmem:[%s4 + $0x1f0] sm:$0xff]
        %v971 = vld [vmem:[%s4 + $0x1f8] sm:$0xff]
        %972 = vmatprep.subr.mxu0 %v909
        %973 = vmatpush1.msra.mxu0 %v908
        %974 = vmatprep.subr.mxu0 %v913
        %975 = vmatpush1.msra.mxu0 %v912
        %976 = vmatprep.subr.mxu0 %v917
        %977 = vmatpush1.msra.mxu0 %v916
        %978 = vmatprep.subr.mxu0 %v921
        %979 = vmatpush1.msra.mxu0 %v920
        %980 = vmatprep.subr.mxu0 %v925
        %981 = vmatpush1.msra.mxu0 %v924
        %982 = vmatprep.subr.mxu0 %v929
        %983 = vmatpush1.msra.mxu0 %v928
        %984 = vmatprep.subr.mxu0 %v933
        %985 = vmatpush1.msra.mxu0 %v932
        %986 = vmatprep.subr.mxu0 %v937
        %987 = vmatpush1.msra.mxu0 %v936
        %988 = vmatprep.subr.mxu0 %v941
        %989 = vmatpush1.msra.mxu0 %v940
        %990 = vmatprep.subr.mxu0 %v945
        %991 = vmatpush1.msra.mxu0 %v944
        %992 = vmatprep.subr.mxu0 %v949
        %993 = vmatpush1.msra.mxu0 %v948
        %994 = vmatprep.subr.mxu0 %v953
        %995 = vmatpush1.msra.mxu0 %v952
        %996 = vmatprep.subr.mxu0 %v957
        %997 = vmatpush1.msra.mxu0 %v956
        %998 = vmatprep.subr.mxu0 %v961
        %999 = vmatpush1.msra.mxu0 %v960
        %1000 = vmatprep.subr.mxu0 %v965
        %1001 = vmatpush1.msra.mxu0 %v964
        %1002 = vmatprep.subr.mxu0 %v969
        %1003 = vmatpush1.msra.mxu0 %v968
        %1004 = vmatprep.subr.mxu0 0.0
        %1005 = vmatpush1.msra.mxu0 0.0
        %1006 = vmatprep.subr.mxu0 0.0
        %1007 = vmatpush1.msra.mxu0 0.0
        %1008 = vmatprep.subr.mxu0 0.0
        %1009 = vmatpush1.msra.mxu0 0.0
        %1010 = vmatprep.subr.mxu0 0.0
        %1011 = vmatpush1.msra.mxu0 0.0
        %1012 = vmatprep.subr.mxu0 0.0
        %1013 = vmatpush1.msra.mxu0 0.0
        %1014 = vmatprep.subr.mxu0 0.0
        %1015 = vmatpush1.msra.mxu0 0.0
        %1016 = vmatprep.subr.mxu0 0.0
        %1017 = vmatpush1.msra.mxu0 0.0
        %1018 = vmatprep.subr.mxu0 0.0
        %1019 = vmatpush1.msra.mxu0 0.0
        %1020 = vmatprep.subr.mxu0 0.0
        %1021 = vmatpush1.msra.mxu0 0.0
        %1022 = vmatprep.subr.mxu0 0.0
        %1023 = vmatpush1.msra.mxu0 0.0
        %1024 = vmatprep.subr.mxu0 0.0
        %1025 = vmatpush1.msra.mxu0 0.0
        %1026 = vmatprep.subr.mxu0 0.0
        %1027 = vmatpush1.msra.mxu0 0.0
        %1028 = vmatprep.subr.mxu0 0.0
        %1029 = vmatpush1.msra.mxu0 0.0
        %1030 = vmatprep.subr.mxu0 0.0
        %1031 = vmatpush1.msra.mxu0 0.0
        %1032 = vmatprep.subr.mxu0 0.0
        %1033 = vmatpush1.msra.mxu0 0.0
        %1034 = vmatprep.subr.mxu0 0.0
        %1035 = vmatpush1.msra.mxu0 0.0
        %1036 = vmatprep.mubr.f32.mxu0 0.0
        %1037 = vmatmul.mubr.f32.gmra.mrb[0].mxu0 %v899
        %v1038 = vpop.f32.mrb[0].mxu0
        %v1039 = vadd.f32 0.0, %v1038
        %v1040 = vpop.f32.mrb[0].mxu0
        %v1041 = vadd.f32 0.0, %v1040
        %1042 = vdwg.mxu0
        %1043 = vmatprep.subr.mxu0 %v911
        %1044 = vmatpush1.msra.mxu0 %v910
        %1045 = vmatprep.subr.mxu0 %v915
        %1046 = vmatpush1.msra.mxu0 %v914
        %1047 = vmatprep.subr.mxu0 %v919
        %1048 = vmatpush1.msra.mxu0 %v918
        %1049 = vmatprep.subr.mxu0 %v923
        %1050 = vmatpush1.msra.mxu0 %v922
        %1051 = vmatprep.subr.mxu0 %v927
        %1052 = vmatpush1.msra.mxu0 %v926
        %1053 = vmatprep.subr.mxu0 %v931
        %1054 = vmatpush1.msra.mxu0 %v930
        %1055 = vmatprep.subr.mxu0 %v935
        %1056 = vmatpush1.msra.mxu0 %v934
        %1057 = vmatprep.subr.mxu0 %v939
        %1058 = vmatpush1.msra.mxu0 %v938
        %1059 = vmatprep.subr.mxu0 %v943
        %1060 = vmatpush1.msra.mxu0 %v942
        %1061 = vmatprep.subr.mxu0 %v947
        %1062 = vmatpush1.msra.mxu0 %v946
        %1063 = vmatprep.subr.mxu0 %v951
        %1064 = vmatpush1.msra.mxu0 %v950
        %1065 = vmatprep.subr.mxu0 %v955
        %1066 = vmatpush1.msra.mxu0 %v954
        %1067 = vmatprep.subr.mxu0 %v959
        %1068 = vmatpush1.msra.mxu0 %v958
        %1069 = vmatprep.subr.mxu0 %v963
        %1070 = vmatpush1.msra.mxu0 %v962
        %1071 = vmatprep.subr.mxu0 %v967
        %1072 = vmatpush1.msra.mxu0 %v966
        %1073 = vmatprep.subr.mxu0 %v971
        %1074 = vmatpush1.msra.mxu0 %v970
        %1075 = vmatprep.subr.mxu0 0.0
        %1076 = vmatpush1.msra.mxu0 0.0
        %1077 = vmatprep.subr.mxu0 0.0
        %1078 = vmatpush1.msra.mxu0 0.0
        %1079 = vmatprep.subr.mxu0 0.0
        %1080 = vmatpush1.msra.mxu0 0.0
        %1081 = vmatprep.subr.mxu0 0.0
        %1082 = vmatpush1.msra.mxu0 0.0
        %1083 = vmatprep.subr.mxu0 0.0
        %1084 = vmatpush1.msra.mxu0 0.0
        %1085 = vmatprep.subr.mxu0 0.0
        %1086 = vmatpush1.msra.mxu0 0.0
        %1087 = vmatprep.subr.mxu0 0.0
        %1088 = vmatpush1.msra.mxu0 0.0
        %1089 = vmatprep.subr.mxu0 0.0
        %1090 = vmatpush1.msra.mxu0 0.0
        %1091 = vmatprep.subr.mxu0 0.0
        %1092 = vmatpush1.msra.mxu0 0.0
        %1093 = vmatprep.subr.mxu0 0.0
        %1094 = vmatpush1.msra.mxu0 0.0
        %1095 = vmatprep.subr.mxu0 0.0
        %1096 = vmatpush1.msra.mxu0 0.0
        %1097 = vmatprep.subr.mxu0 0.0
        %1098 = vmatpush1.msra.mxu0 0.0
        %1099 = vmatprep.subr.mxu0 0.0
        %1100 = vmatpush1.msra.mxu0 0.0
        %1101 = vmatprep.subr.mxu0 0.0
        %1102 = vmatpush1.msra.mxu0 0.0
        %1103 = vmatprep.subr.mxu0 0.0
        %1104 = vmatpush1.msra.mxu0 0.0
        %1105 = vmatprep.subr.mxu0 0.0
        %1106 = vmatpush1.msra.mxu0 0.0
        %1107 = vmatprep.mubr.f32.mxu0 0.0
        %1108 = vmatmul.mubr.f32.gmra.mrb[0].mxu0 %v899
        %v1109 = vpop.f32.mrb[0].mxu0
        %v1110 = vadd.f32 0.0, %v1109
        %v1111 = vpop.f32.mrb[0].mxu0
        %v1112 = vadd.f32 0.0, %v1111
        %1113 = vdwg.mxu0
        %v1114 = vadd.f32 %v904, %v1039
        %v1115 = vadd.f32 %v905, %v1041
        %v1116 = vadd.f32 %v906, %v1110
        %v1117 = vadd.f32 %v907, %v1112
        %v1118 = vxor.u32 %v1114, 2147483648
        %v1119 = vxor.u32 %v1115, 2147483648
        %v1120 = vxor.u32 %v1116, 2147483648
        %v1121 = vmul.f32 %v1118, 1.442695
        %v1122 = vpow.pop %v1121
        %v1123 = vmul.f32 %v1119, 1.442695
        %v1124 = vpow.pop %v1123
        %v1125 = vmul.f32 %v1120, 1.442695
        %v1126 = vpow.pop %v1125
        %v1127 = vadd.f32 %v1122, 1.0
        %v1128 = vadd.f32 %v1124, 1.0
        %v1129 = vadd.f32 %v1126, 1.0
        %v1130 = vrcp.pop %v1127
        %v1131 = vmul.f32 1.0, %v1130
        %v1132 = vrcp.pop %v1128
        %v1133 = vmul.f32 1.0, %v1132
        %v1134 = vrcp.pop %v1129
        %v1135 = vmul.f32 1.0, %v1134
        %v1136 = vtanh.pop %v1117
        %v1137 = vmul.f32 %v1133, %v897
        %v1138 = vmul.f32 %v1131, %v1136
        %v1139 = vadd.f32 %v1137, %v1138
        %v1140 = vtanh.pop %v1139
        %v1141 = vmul.f32 %v1135, %v1140
        %s1142 = scalar_lea.vmem %s310, 8 [#allocation6]
        %1143 = vst [vmem:[%s1142] sm:$0xff] %v1141
        %s1144 = smul.u32 2, 4
        %s1145 = smul.addr %s1144, 8
        %s1146 = scalar_lea.vmem [#allocation2], %s1145
        %v1147 = vld [vmem:[%s1146] sm:$0xff]
        %v1148 = vld [vmem:[%s1146 + $0x8] sm:$0xff]
        %v1149 = vld [vmem:[%s1146 + $0x10] sm:$0xff]
        %v1150 = vld [vmem:[%s1146 + $0x18] sm:$0xff]
        %v1151 = vld [vmem:[%s4] sm:$0xff]
        %v1152 = vld [vmem:[%s4 + $0x8] sm:$0xff]
        %v1153 = vld [vmem:[%s4 + $0x10] sm:$0xff]
        %v1154 = vld [vmem:[%s4 + $0x18] sm:$0xff]
        %v1155 = vld [vmem:[%s4 + $0x20] sm:$0xff]
        %v1156 = vld [vmem:[%s4 + $0x28] sm:$0xff]
        %v1157 = vld [vmem:[%s4 + $0x30] sm:$0xff]
        %v1158 = vld [vmem:[%s4 + $0x38] sm:$0xff]
        %v1159 = vld [vmem:[%s4 + $0x40] sm:$0xff]
        %v1160 = vld [vmem:[%s4 + $0x48] sm:$0xff]
        %v1161 = vld [vmem:[%s4 + $0x50] sm:$0xff]
        %v1162 = vld [vmem:[%s4 + $0x58] sm:$0xff]
        %v1163 = vld [vmem:[%s4 + $0x60] sm:$0xff]
        %v1164 = vld [vmem:[%s4 + $0x68] sm:$0xff]
        %v1165 = vld [vmem:[%s4 + $0x70] sm:$0xff]
        %v1166 = vld [vmem:[%s4 + $0x78] sm:$0xff]
        %v1167 = vld [vmem:[%s4 + $0x80] sm:$0xff]
        %v1168 = vld [vmem:[%s4 + $0x88] sm:$0xff]
        %v1169 = vld [vmem:[%s4 + $0x90] sm:$0xff]
        %v1170 = vld [vmem:[%s4 + $0x98] sm:$0xff]
        %v1171 = vld [vmem:[%s4 + $0xa0] sm:$0xff]
        %v1172 = vld [vmem:[%s4 + $0xa8] sm:$0xff]
        %v1173 = vld [vmem:[%s4 + $0xb0] sm:$0xff]
        %v1174 = vld [vmem:[%s4 + $0xb8] sm:$0xff]
        %v1175 = vld [vmem:[%s4 + $0xc0] sm:$0xff]
        %v1176 = vld [vmem:[%s4 + $0xc8] sm:$0xff]
        %v1177 = vld [vmem:[%s4 + $0xd0] sm:$0xff]
        %v1178 = vld [vmem:[%s4 + $0xd8] sm:$0xff]
        %v1179 = vld [vmem:[%s4 + $0xe0] sm:$0xff]
        %v1180 = vld [vmem:[%s4 + $0xe8] sm:$0xff]
        %v1181 = vld [vmem:[%s4 + $0xf0] sm:$0xff]
        %v1182 = vld [vmem:[%s4 + $0xf8] sm:$0xff]
        %v1183 = vld [vmem:[%s4 + $0x100] sm:$0xff]
        %v1184 = vld [vmem:[%s4 + $0x108] sm:$0xff]
        %v1185 = vld [vmem:[%s4 + $0x110] sm:$0xff]
        %v1186 = vld [vmem:[%s4 + $0x118] sm:$0xff]
        %v1187 = vld [vmem:[%s4 + $0x120] sm:$0xff]
        %v1188 = vld [vmem:[%s4 + $0x128] sm:$0xff]
        %v1189 = vld [vmem:[%s4 + $0x130] sm:$0xff]
        %v1190 = vld [vmem:[%s4 + $0x138] sm:$0xff]
        %v1191 = vld [vmem:[%s4 + $0x140] sm:$0xff]
        %v1192 = vld [vmem:[%s4 + $0x148] sm:$0xff]
        %v1193 = vld [vmem:[%s4 + $0x150] sm:$0xff]
        %v1194 = vld [vmem:[%s4 + $0x158] sm:$0xff]
        %v1195 = vld [vmem:[%s4 + $0x160] sm:$0xff]
        %v1196 = vld [vmem:[%s4 + $0x168] sm:$0xff]
        %v1197 = vld [vmem:[%s4 + $0x170] sm:$0xff]
        %v1198 = vld [vmem:[%s4 + $0x178] sm:$0xff]
        %v1199 = vld [vmem:[%s4 + $0x180] sm:$0xff]
        %v1200 = vld [vmem:[%s4 + $0x188] sm:$0xff]
        %v1201 = vld [vmem:[%s4 + $0x190] sm:$0xff]
        %v1202 = vld [vmem:[%s4 + $0x198] sm:$0xff]
        %v1203 = vld [vmem:[%s4 + $0x1a0] sm:$0xff]
        %v1204 = vld [vmem:[%s4 + $0x1a8] sm:$0xff]
        %v1205 = vld [vmem:[%s4 + $0x1b0] sm:$0xff]
        %v1206 = vld [vmem:[%s4 + $0x1b8] sm:$0xff]
        %v1207 = vld [vmem:[%s4 + $0x1c0] sm:$0xff]
        %v1208 = vld [vmem:[%s4 + $0x1c8] sm:$0xff]
        %v1209 = vld [vmem:[%s4 + $0x1d0] sm:$0xff]
        %v1210 = vld [vmem:[%s4 + $0x1d8] sm:$0xff]
        %v1211 = vld [vmem:[%s4 + $0x1e0] sm:$0xff]
        %v1212 = vld [vmem:[%s4 + $0x1e8] sm:$0xff]
        %v1213 = vld [vmem:[%s4 + $0x1f0] sm:$0xff]
        %v1214 = vld [vmem:[%s4 + $0x1f8] sm:$0xff]
        %1215 = vmatprep.subr.mxu0 %v1152
        %1216 = vmatpush1.msra.mxu0 %v1151
        %1217 = vmatprep.subr.mxu0 %v1156
        %1218 = vmatpush1.msra.mxu0 %v1155
        %1219 = vmatprep.subr.mxu0 %v1160
        %1220 = vmatpush1.msra.mxu0 %v1159
        %1221 = vmatprep.subr.mxu0 %v1164
        %1222 = vmatpush1.msra.mxu0 %v1163
        %1223 = vmatprep.subr.mxu0 %v1168
        %1224 = vmatpush1.msra.mxu0 %v1167
        %1225 = vmatprep.subr.mxu0 %v1172
        %1226 = vmatpush1.msra.mxu0 %v1171
        %1227 = vmatprep.subr.mxu0 %v1176
        %1228 = vmatpush1.msra.mxu0 %v1175
        %1229 = vmatprep.subr.mxu0 %v1180
        %1230 = vmatpush1.msra.mxu0 %v1179
        %1231 = vmatprep.subr.mxu0 %v1184
        %1232 = vmatpush1.msra.mxu0 %v1183
        %1233 = vmatprep.subr.mxu0 %v1188
        %1234 = vmatpush1.msra.mxu0 %v1187
        %1235 = vmatprep.subr.mxu0 %v1192
        %1236 = vmatpush1.msra.mxu0 %v1191
        %1237 = vmatprep.subr.mxu0 %v1196
        %1238 = vmatpush1.msra.mxu0 %v1195
        %1239 = vmatprep.subr.mxu0 %v1200
        %1240 = vmatpush1.msra.mxu0 %v1199
        %1241 = vmatprep.subr.mxu0 %v1204
        %1242 = vmatpush1.msra.mxu0 %v1203
        %1243 = vmatprep.subr.mxu0 %v1208
        %1244 = vmatpush1.msra.mxu0 %v1207
        %1245 = vmatprep.subr.mxu0 %v1212
        %1246 = vmatpush1.msra.mxu0 %v1211
        %1247 = vmatprep.subr.mxu0 0.0
        %1248 = vmatpush1.msra.mxu0 0.0
        %1249 = vmatprep.subr.mxu0 0.0
        %1250 = vmatpush1.msra.mxu0 0.0
        %1251 = vmatprep.subr.mxu0 0.0
        %1252 = vmatpush1.msra.mxu0 0.0
        %1253 = vmatprep.subr.mxu0 0.0
        %1254 = vmatpush1.msra.mxu0 0.0
        %1255 = vmatprep.subr.mxu0 0.0
        %1256 = vmatpush1.msra.mxu0 0.0
        %1257 = vmatprep.subr.mxu0 0.0
        %1258 = vmatpush1.msra.mxu0 0.0
        %1259 = vmatprep.subr.mxu0 0.0
        %1260 = vmatpush1.msra.mxu0 0.0
        %1261 = vmatprep.subr.mxu0 0.0
        %1262 = vmatpush1.msra.mxu0 0.0
        %1263 = vmatprep.subr.mxu0 0.0
        %1264 = vmatpush1.msra.mxu0 0.0
        %1265 = vmatprep.subr.mxu0 0.0
        %1266 = vmatpush1.msra.mxu0 0.0
        %1267 = vmatprep.subr.mxu0 0.0
        %1268 = vmatpush1.msra.mxu0 0.0
        %1269 = vmatprep.subr.mxu0 0.0
        %1270 = vmatpush1.msra.mxu0 0.0
        %1271 = vmatprep.subr.mxu0 0.0
        %1272 = vmatpush1.msra.mxu0 0.0
        %1273 = vmatprep.subr.mxu0 0.0
        %1274 = vmatpush1.msra.mxu0 0.0
        %1275 = vmatprep.subr.mxu0 0.0
        %1276 = vmatpush1.msra.mxu0 0.0
        %1277 = vmatprep.subr.mxu0 0.0
        %1278 = vmatpush1.msra.mxu0 0.0
        %1279 = vmatprep.mubr.f32.mxu0 0.0
        %1280 = vmatmul.mubr.f32.gmra.mrb[0].mxu0 %v1141
        %v1281 = vpop.f32.mrb[0].mxu0
        %v1282 = vadd.f32 0.0, %v1281
        %v1283 = vpop.f32.mrb[0].mxu0
        %v1284 = vadd.f32 0.0, %v1283
        %1285 = vdwg.mxu0
        %1286 = vmatprep.subr.mxu0 %v1154
        %1287 = vmatpush1.msra.mxu0 %v1153
        %1288 = vmatprep.subr.mxu0 %v1158
        %1289 = vmatpush1.msra.mxu0 %v1157
        %1290 = vmatprep.subr.mxu0 %v1162
        %1291 = vmatpush1.msra.mxu0 %v1161
        %1292 = vmatprep.subr.mxu0 %v1166
        %1293 = vmatpush1.msra.mxu0 %v1165
        %1294 = vmatprep.subr.mxu0 %v1170
        %1295 = vmatpush1.msra.mxu0 %v1169
        %1296 = vmatprep.subr.mxu0 %v1174
        %1297 = vmatpush1.msra.mxu0 %v1173
        %1298 = vmatprep.subr.mxu0 %v1178
        %1299 = vmatpush1.msra.mxu0 %v1177
        %1300 = vmatprep.subr.mxu0 %v1182
        %1301 = vmatpush1.msra.mxu0 %v1181
        %1302 = vmatprep.subr.mxu0 %v1186
        %1303 = vmatpush1.msra.mxu0 %v1185
        %1304 = vmatprep.subr.mxu0 %v1190
        %1305 = vmatpush1.msra.mxu0 %v1189
        %1306 = vmatprep.subr.mxu0 %v1194
        %1307 = vmatpush1.msra.mxu0 %v1193
        %1308 = vmatprep.subr.mxu0 %v1198
        %1309 = vmatpush1.msra.mxu0 %v1197
        %1310 = vmatprep.subr.mxu0 %v1202
        %1311 = vmatpush1.msra.mxu0 %v1201
        %1312 = vmatprep.subr.mxu0 %v1206
        %1313 = vmatpush1.msra.mxu0 %v1205
        %1314 = vmatprep.subr.mxu0 %v1210
        %1315 = vmatpush1.msra.mxu0 %v1209
        %1316 = vmatprep.subr.mxu0 %v1214
        %1317 = vmatpush1.msra.mxu0 %v1213
        %1318 = vmatprep.subr.mxu0 0.0
        %1319 = vmatpush1.msra.mxu0 0.0
        %1320 = vmatprep.subr.mxu0 0.0
        %1321 = vmatpush1.msra.mxu0 0.0
        %1322 = vmatprep.subr.mxu0 0.0
        %1323 = vmatpush1.msra.mxu0 0.0
        %1324 = vmatprep.subr.mxu0 0.0
        %1325 = vmatpush1.msra.mxu0 0.0
        %1326 = vmatprep.subr.mxu0 0.0
        %1327 = vmatpush1.msra.mxu0 0.0
        %1328 = vmatprep.subr.mxu0 0.0
        %1329 = vmatpush1.msra.mxu0 0.0
        %1330 = vmatprep.subr.mxu0 0.0
        %1331 = vmatpush1.msra.mxu0 0.0
        %1332 = vmatprep.subr.mxu0 0.0
        %1333 = vmatpush1.msra.mxu0 0.0
        %1334 = vmatprep.subr.mxu0 0.0
        %1335 = vmatpush1.msra.mxu0 0.0
        %1336 = vmatprep.subr.mxu0 0.0
        %1337 = vmatpush1.msra.mxu0 0.0
        %1338 = vmatprep.subr.mxu0 0.0
        %1339 = vmatpush1.msra.mxu0 0.0
        %1340 = vmatprep.subr.mxu0 0.0
        %1341 = vmatpush1.msra.mxu0 0.0
        %1342 = vmatprep.subr.mxu0 0.0
        %1343 = vmatpush1.msra.mxu0 0.0
        %1344 = vmatprep.subr.mxu0 0.0
        %1345 = vmatpush1.msra.mxu0 0.0
        %1346 = vmatprep.subr.mxu0 0.0
        %1347 = vmatpush1.msra.mxu0 0.0
        %1348 = vmatprep.subr.mxu0 0.0
        %1349 = vmatpush1.msra.mxu0 0.0
        %1350 = vmatprep.mubr.f32.mxu0 0.0
        %1351 = vmatmul.mubr.f32.gmra.mrb[0].mxu0 %v1141
        %v1352 = vpop.f32.mrb[0].mxu0
        %v1353 = vadd.f32 0.0, %v1352
        %v1354 = vpop.f32.mrb[0].mxu0
        %v1355 = vadd.f32 0.0, %v1354
        %1356 = vdwg.mxu0
        %v1357 = vadd.f32 %v1147, %v1282
        %v1358 = vadd.f32 %v1148, %v1284
        %v1359 = vadd.f32 %v1149, %v1353
        %v1360 = vadd.f32 %v1150, %v1355
        %v1361 = vxor.u32 %v1357, 2147483648
        %v1362 = vxor.u32 %v1358, 2147483648
        %v1363 = vxor.u32 %v1359, 2147483648
        %v1364 = vmul.f32 %v1361, 1.442695
        %v1365 = vpow.pop %v1364
        %v1366 = vmul.f32 %v1362, 1.442695
        %v1367 = vpow.pop %v1366
        %v1368 = vmul.f32 %v1363, 1.442695
        %v1369 = vpow.pop %v1368
        %v1370 = vadd.f32 %v1365, 1.0
        %v1371 = vadd.f32 %v1367, 1.0
        %v1372 = vadd.f32 %v1369, 1.0
        %v1373 = vrcp.pop %v1370
        %v1374 = vmul.f32 1.0, %v1373
        %v1375 = vrcp.pop %v1371
        %v1376 = vmul.f32 1.0, %v1375
        %v1377 = vrcp.pop %v1372
        %v1378 = vmul.f32 1.0, %v1377
        %v1379 = vtanh.pop %v1360
        %v1380 = vmul.f32 %v1376, %v1139
        %v1381 = vmul.f32 %v1374, %v1379
        %v1382 = vadd.f32 %v1380, %v1381
        %v1383 = vtanh.pop %v1382
        %v1384 = vmul.f32 %v1378, %v1383
        %s1385 = scalar_lea.vmem %s310, 16 [#allocation6]
        %1386 = vst [vmem:[%s1385] sm:$0xff] %v1384
        %s1387 = smul.u32 3, 4
        %s1388 = smul.addr %s1387, 8
        %s1389 = scalar_lea.vmem [#allocation2], %s1388
        %v1390 = vld [vmem:[%s1389] sm:$0xff]
        %v1391 = vld [vmem:[%s1389 + $0x8] sm:$0xff]
        %v1392 = vld [vmem:[%s1389 + $0x10] sm:$0xff]
        %v1393 = vld [vmem:[%s1389 + $0x18] sm:$0xff]
        %v1394 = vld [vmem:[%s4] sm:$0xff]
        %v1395 = vld [vmem:[%s4 + $0x8] sm:$0xff]
        %v1396 = vld [vmem:[%s4 + $0x10] sm:$0xff]
        %v1397 = vld [vmem:[%s4 + $0x18] sm:$0xff]
        %v1398 = vld [vmem:[%s4 + $0x20] sm:$0xff]
        %v1399 = vld [vmem:[%s4 + $0x28] sm:$0xff]
        %v1400 = vld [vmem:[%s4 + $0x30] sm:$0xff]
        %v1401 = vld [vmem:[%s4 + $0x38] sm:$0xff]
        %v1402 = vld [vmem:[%s4 + $0x40] sm:$0xff]
        %v1403 = vld [vmem:[%s4 + $0x48] sm:$0xff]
        %v1404 = vld [vmem:[%s4 + $0x50] sm:$0xff]
        %v1405 = vld [vmem:[%s4 + $0x58] sm:$0xff]
        %v1406 = vld [vmem:[%s4 + $0x60] sm:$0xff]
        %v1407 = vld [vmem:[%s4 + $0x68] sm:$0xff]
        %v1408 = vld [vmem:[%s4 + $0x70] sm:$0xff]
        %v1409 = vld [vmem:[%s4 + $0x78] sm:$0xff]
        %v1410 = vld [vmem:[%s4 + $0x80] sm:$0xff]
        %v1411 = vld [vmem:[%s4 + $0x88] sm:$0xff]
        %v1412 = vld [vmem:[%s4 + $0x90] sm:$0xff]
        %v1413 = vld [vmem:[%s4 + $0x98] sm:$0xff]
        %v1414 = vld [vmem:[%s4 + $0xa0] sm:$0xff]
        %v1415 = vld [vmem:[%s4 + $0xa8] sm:$0xff]
        %v1416 = vld [vmem:[%s4 + $0xb0] sm:$0xff]
        %v1417 = vld [vmem:[%s4 + $0xb8] sm:$0xff]
        %v1418 = vld [vmem:[%s4 + $0xc0] sm:$0xff]
        %v1419 = vld [vmem:[%s4 + $0xc8] sm:$0xff]
        %v1420 = vld [vmem:[%s4 + $0xd0] sm:$0xff]
        %v1421 = vld [vmem:[%s4 + $0xd8] sm:$0xff]
        %v1422 = vld [vmem:[%s4 + $0xe0] sm:$0xff]
        %v1423 = vld [vmem:[%s4 + $0xe8] sm:$0xff]
        %v1424 = vld [vmem:[%s4 + $0xf0] sm:$0xff]
        %v1425 = vld [vmem:[%s4 + $0xf8] sm:$0xff]
        %v1426 = vld [vmem:[%s4 + $0x100] sm:$0xff]
        %v1427 = vld [vmem:[%s4 + $0x108] sm:$0xff]
        %v1428 = vld [vmem:[%s4 + $0x110] sm:$0xff]
        %v1429 = vld [vmem:[%s4 + $0x118] sm:$0xff]
        %v1430 = vld [vmem:[%s4 + $0x120] sm:$0xff]
        %v1431 = vld [vmem:[%s4 + $0x128] sm:$0xff]
        %v1432 = vld [vmem:[%s4 + $0x130] sm:$0xff]
        %v1433 = vld [vmem:[%s4 + $0x138] sm:$0xff]
        %v1434 = vld [vmem:[%s4 + $0x140] sm:$0xff]
        %v1435 = vld [vmem:[%s4 + $0x148] sm:$0xff]
        %v1436 = vld [vmem:[%s4 + $0x150] sm:$0xff]
        %v1437 = vld [vmem:[%s4 + $0x158] sm:$0xff]
        %v1438 = vld [vmem:[%s4 + $0x160] sm:$0xff]
        %v1439 = vld [vmem:[%s4 + $0x168] sm:$0xff]
        %v1440 = vld [vmem:[%s4 + $0x170] sm:$0xff]
        %v1441 = vld [vmem:[%s4 + $0x178] sm:$0xff]
        %v1442 = vld [vmem:[%s4 + $0x180] sm:$0xff]
        %v1443 = vld [vmem:[%s4 + $0x188] sm:$0xff]
        %v1444 = vld [vmem:[%s4 + $0x190] sm:$0xff]
        %v1445 = vld [vmem:[%s4 + $0x198] sm:$0xff]
        %v1446 = vld [vmem:[%s4 + $0x1a0] sm:$0xff]
        %v1447 = vld [vmem:[%s4 + $0x1a8] sm:$0xff]
        %v1448 = vld [vmem:[%s4 + $0x1b0] sm:$0xff]
        %v1449 = vld [vmem:[%s4 + $0x1b8] sm:$0xff]
        %v1450 = vld [vmem:[%s4 + $0x1c0] sm:$0xff]
        %v1451 = vld [vmem:[%s4 + $0x1c8] sm:$0xff]
        %v1452 = vld [vmem:[%s4 + $0x1d0] sm:$0xff]
        %v1453 = vld [vmem:[%s4 + $0x1d8] sm:$0xff]
        %v1454 = vld [vmem:[%s4 + $0x1e0] sm:$0xff]
        %v1455 = vld [vmem:[%s4 + $0x1e8] sm:$0xff]
        %v1456 = vld [vmem:[%s4 + $0x1f0] sm:$0xff]
        %v1457 = vld [vmem:[%s4 + $0x1f8] sm:$0xff]
        %1458 = vmatprep.subr.mxu0 %v1395
        %1459 = vmatpush1.msra.mxu0 %v1394
        %1460 = vmatprep.subr.mxu0 %v1399
        %1461 = vmatpush1.msra.mxu0 %v1398
        %1462 = vmatprep.subr.mxu0 %v1403
        %1463 = vmatpush1.msra.mxu0 %v1402
        %1464 = vmatprep.subr.mxu0 %v1407
        %1465 = vmatpush1.msra.mxu0 %v1406
        %1466 = vmatprep.subr.mxu0 %v1411
        %1467 = vmatpush1.msra.mxu0 %v1410
        %1468 = vmatprep.subr.mxu0 %v1415
        %1469 = vmatpush1.msra.mxu0 %v1414
        %1470 = vmatprep.subr.mxu0 %v1419
        %1471 = vmatpush1.msra.mxu0 %v1418
        %1472 = vmatprep.subr.mxu0 %v1423
        %1473 = vmatpush1.msra.mxu0 %v1422
        %1474 = vmatprep.subr.mxu0 %v1427
        %1475 = vmatpush1.msra.mxu0 %v1426
        %1476 = vmatprep.subr.mxu0 %v1431
        %1477 = vmatpush1.msra.mxu0 %v1430
        %1478 = vmatprep.subr.mxu0 %v1435
        %1479 = vmatpush1.msra.mxu0 %v1434
        %1480 = vmatprep.subr.mxu0 %v1439
        %1481 = vmatpush1.msra.mxu0 %v1438
        %1482 = vmatprep.subr.mxu0 %v1443
        %1483 = vmatpush1.msra.mxu0 %v1442
        %1484 = vmatprep.subr.mxu0 %v1447
        %1485 = vmatpush1.msra.mxu0 %v1446
        %1486 = vmatprep.subr.mxu0 %v1451
        %1487 = vmatpush1.msra.mxu0 %v1450
        %1488 = vmatprep.subr.mxu0 %v1455
        %1489 = vmatpush1.msra.mxu0 %v1454
        %1490 = vmatprep.subr.mxu0 0.0
        %1491 = vmatpush1.msra.mxu0 0.0
        %1492 = vmatprep.subr.mxu0 0.0
        %1493 = vmatpush1.msra.mxu0 0.0
        %1494 = vmatprep.subr.mxu0 0.0
        %1495 = vmatpush1.msra.mxu0 0.0
        %1496 = vmatprep.subr.mxu0 0.0
        %1497 = vmatpush1.msra.mxu0 0.0
        %1498 = vmatprep.subr.mxu0 0.0
        %1499 = vmatpush1.msra.mxu0 0.0
        %1500 = vmatprep.subr.mxu0 0.0
        %1501 = vmatpush1.msra.mxu0 0.0
        %1502 = vmatprep.subr.mxu0 0.0
        %1503 = vmatpush1.msra.mxu0 0.0
        %1504 = vmatprep.subr.mxu0 0.0
        %1505 = vmatpush1.msra.mxu0 0.0
        %1506 = vmatprep.subr.mxu0 0.0
        %1507 = vmatpush1.msra.mxu0 0.0
        %1508 = vmatprep.subr.mxu0 0.0
        %1509 = vmatpush1.msra.mxu0 0.0
        %1510 = vmatprep.subr.mxu0 0.0
        %1511 = vmatpush1.msra.mxu0 0.0
        %1512 = vmatprep.subr.mxu0 0.0
        %1513 = vmatpush1.msra.mxu0 0.0
        %1514 = vmatprep.subr.mxu0 0.0
        %1515 = vmatpush1.msra.mxu0 0.0
        %1516 = vmatprep.subr.mxu0 0.0
        %1517 = vmatpush1.msra.mxu0 0.0
        %1518 = vmatprep.subr.mxu0 0.0
        %1519 = vmatpush1.msra.mxu0 0.0
        %1520 = vmatprep.subr.mxu0 0.0
        %1521 = vmatpush1.msra.mxu0 0.0
        %1522 = vmatprep.mubr.f32.mxu0 0.0
        %1523 = vmatmul.mubr.f32.gmra.mrb[0].mxu0 %v1384
        %v1524 = vpop.f32.mrb[0].mxu0
        %v1525 = vadd.f32 0.0, %v1524
        %v1526 = vpop.f32.mrb[0].mxu0
        %v1527 = vadd.f32 0.0, %v1526
        %1528 = vdwg.mxu0
        %1529 = vmatprep.subr.mxu0 %v1397
        %1530 = vmatpush1.msra.mxu0 %v1396
        %1531 = vmatprep.subr.mxu0 %v1401
        %1532 = vmatpush1.msra.mxu0 %v1400
        %1533 = vmatprep.subr.mxu0 %v1405
        %1534 = vmatpush1.msra.mxu0 %v1404
        %1535 = vmatprep.subr.mxu0 %v1409
        %1536 = vmatpush1.msra.mxu0 %v1408
        %1537 = vmatprep.subr.mxu0 %v1413
        %1538 = vmatpush1.msra.mxu0 %v1412
        %1539 = vmatprep.subr.mxu0 %v1417
        %1540 = vmatpush1.msra.mxu0 %v1416
        %1541 = vmatprep.subr.mxu0 %v1421
        %1542 = vmatpush1.msra.mxu0 %v1420
        %1543 = vmatprep.subr.mxu0 %v1425
        %1544 = vmatpush1.msra.mxu0 %v1424
        %1545 = vmatprep.subr.mxu0 %v1429
        %1546 = vmatpush1.msra.mxu0 %v1428
        %1547 = vmatprep.subr.mxu0 %v1433
        %1548 = vmatpush1.msra.mxu0 %v1432
        %1549 = vmatprep.subr.mxu0 %v1437
        %1550 = vmatpush1.msra.mxu0 %v1436
        %1551 = vmatprep.subr.mxu0 %v1441
        %1552 = vmatpush1.msra.mxu0 %v1440
        %1553 = vmatprep.subr.mxu0 %v1445
        %1554 = vmatpush1.msra.mxu0 %v1444
        %1555 = vmatprep.subr.mxu0 %v1449
        %1556 = vmatpush1.msra.mxu0 %v1448
        %1557 = vmatprep.subr.mxu0 %v1453
        %1558 = vmatpush1.msra.mxu0 %v1452
        %1559 = vmatprep.subr.mxu0 %v1457
        %1560 = vmatpush1.msra.mxu0 %v1456
        %1561 = vmatprep.subr.mxu0 0.0
        %1562 = vmatpush1.msra.mxu0 0.0
        %1563 = vmatprep.subr.mxu0 0.0
        %1564 = vmatpush1.msra.mxu0 0.0
        %1565 = vmatprep.subr.mxu0 0.0
        %1566 = vmatpush1.msra.mxu0 0.0
        %1567 = vmatprep.subr.mxu0 0.0
        %1568 = vmatpush1.msra.mxu0 0.0
        %1569 = vmatprep.subr.mxu0 0.0
        %1570 = vmatpush1.msra.mxu0 0.0
        %1571 = vmatprep.subr.mxu0 0.0
        %1572 = vmatpush1.msra.mxu0 0.0
        %1573 = vmatprep.subr.mxu0 0.0
        %1574 = vmatpush1.msra.mxu0 0.0
        %1575 = vmatprep.subr.mxu0 0.0
        %1576 = vmatpush1.msra.mxu0 0.0
        %1577 = vmatprep.subr.mxu0 0.0
        %1578 = vmatpush1.msra.mxu0 0.0
        %1579 = vmatprep.subr.mxu0 0.0
        %1580 = vmatpush1.msra.mxu0 0.0
        %1581 = vmatprep.subr.mxu0 0.0
        %1582 = vmatpush1.msra.mxu0 0.0
        %1583 = vmatprep.subr.mxu0 0.0
        %1584 = vmatpush1.msra.mxu0 0.0
        %1585 = vmatprep.subr.mxu0 0.0
        %1586 = vmatpush1.msra.mxu0 0.0
        %1587 = vmatprep.subr.mxu0 0.0
        %1588 = vmatpush1.msra.mxu0 0.0
        %1589 = vmatprep.subr.mxu0 0.0
        %1590 = vmatpush1.msra.mxu0 0.0
        %1591 = vmatprep.subr.mxu0 0.0
        %1592 = vmatpush1.msra.mxu0 0.0
        %1593 = vmatprep.mubr.f32.mxu0 0.0
        %1594 = vmatmul.mubr.f32.gmra.mrb[0].mxu0 %v1384
        %v1595 = vpop.f32.mrb[0].mxu0
        %v1596 = vadd.f32 0.0, %v1595
        %v1597 = vpop.f32.mrb[0].mxu0
        %v1598 = vadd.f32 0.0, %v1597
        %1599 = vdwg.mxu0
        %v1600 = vadd.f32 %v1390, %v1525
        %v1601 = vadd.f32 %v1391, %v1527
        %v1602 = vadd.f32 %v1392, %v1596
        %v1603 = vadd.f32 %v1393, %v1598
        %v1604 = vxor.u32 %v1600, 2147483648
        %v1605 = vxor.u32 %v1601, 2147483648
        %v1606 = vxor.u32 %v1602, 2147483648
        %v1607 = vmul.f32 %v1604, 1.442695
        %v1608 = vpow.pop %v1607
        %v1609 = vmul.f32 %v1605, 1.442695
        %v1610 = vpow.pop %v1609
        %v1611 = vmul.f32 %v1606, 1.442695
        %v1612 = vpow.pop %v1611
        %v1613 = vadd.f32 %v1608, 1.0
        %v1614 = vadd.f32 %v1610, 1.0
        %v1615 = vadd.f32 %v1612, 1.0
        %v1616 = vrcp.pop %v1613
        %v1617 = vmul.f32 1.0, %v1616
        %v1618 = vrcp.pop %v1614
        %v1619 = vmul.f32 1.0, %v1618
        %v1620 = vrcp.pop %v1615
        %v1621 = vmul.f32 1.0, %v1620
        %v1622 = vtanh.pop %v1603
        %v1623 = vmul.f32 %v1619, %v1382
        %v1624 = vmul.f32 %v1617, %v1622
        %v1625 = vadd.f32 %v1623, %v1624
        %v1626 = vtanh.pop %v1625
        %v1627 = vmul.f32 %v1621, %v1626
        %s1628 = scalar_lea.vmem %s310, 24 [#allocation6]
        %1629 = vst [vmem:[%s1628] sm:$0xff] %v1627
        %1630 = vst [vmem:[#allocation3] sm:$0xff] %v1627
        %1631 = vst [vmem:[#allocation4] sm:$0xff] %v1625
        %s1632 = sand.u32 %s172, 1
        %s1633 = sand.u32 %s172, 1
        %s1634 = smul.addr %s1633, 32
        %s1635 = scalar_lea.vmem [#allocation6], %s1634
        // Predicated region
        $region87: #{lstm_net_forward.1} parent=77 // pred_check
          %p1636 = pneg %p182
        $region88: #{lstm_net_forward.1} parent=77 // pred_check_branch
          %1638 = sbr.rel (%p1636) target = $region90
        $region89: #{lstm_net_forward.1} parent=77 // pred_region
          %s1639 = smul.u32 4, %s22
          %s1640 = smul.addr %s1639, 2
          %s1641 = sadd.s32 %s21, %s1640
          %s1642 = smul.addr %s1641, 8
          %s1643 = scalar_lea.vmem %s6, %s1642
          // Predicated region
          $region91: #{lstm_net_forward.1} parent=89 // pred_check
            _
          $region92: #{lstm_net_forward.1} parent=89 // pred_check_branch
            %1645 = sbr.rel (0) target = $region94
          $region93: #{lstm_net_forward.1} parent=89 // pred_region
            // Predicated region
            $region95: #{lstm_net_forward.1} parent=93 // pred_check
              _
            $region96: #{lstm_net_forward.1} parent=93 // pred_check_branch
              %1647 = sbr.rel (0) target = $region98
            $region97: #{lstm_net_forward.1} parent=93 // pred_region
              // Predicated region
              $region110: #{lstm_net_forward.1} parent=97 // pred_check
                _
              $region111: #{lstm_net_forward.1} parent=97 // pred_check_branch
                %1668 = sbr.rel (0) target = $region113
              $region112: #{lstm_net_forward.1} parent=97 // pred_region
                loop: start=0, step=1, limit=1
                $region114: #{lstm_net_forward.1} parent=112 // loop_pre_header
                  _
                $region115: #{lstm_net_forward.1} parent=112 // loop_header
                  %s1670 = sphi 0, %s1674
                  %p1671 = scmp.ge.s32.totalorder %s1670, 1
                  %s1675 = sphi %s1635, %s1635
                  %s1676 = sphi %s1643, %s1643
                $region116: #{lstm_net_forward.1} parent=112 // loop_header_branch
                  %1673 = sbr.rel (%p1671) target = $region120
                $region117: #{lstm_net_forward.1} parent=112 // loop_body
                  %v1677 = vld [vmem:[%s1675] sm:$0xff]
                  %1678 = vst [vmem:[%s1676] sm:$0xff] %v1677
                  %v1679 = vld [vmem:[%s1675 + $0x8] sm:$0xff]
                  %1680 = vst [vmem:[%s1676 + $0x10] sm:$0xff] %v1679
                  %v1681 = vld [vmem:[%s1675 + $0x10] sm:$0xff]
                  %1682 = vst [vmem:[%s1676 + $0x20] sm:$0xff] %v1681
                  %v1683 = vld [vmem:[%s1675 + $0x18] sm:$0xff]
                  %1684 = vst [vmem:[%s1676 + $0x30] sm:$0xff] %v1683
                $region118: #{lstm_net_forward.1} parent=112 // loop_footer
                  %s1674 = sadd.s32 1, %s1670
                $region119: #{lstm_net_forward.1} parent=112 // loop_footer_branch
                  %1669 = sbr.rel target = $region115
                $region120: #{lstm_net_forward.1} parent=112 // loop_exit
                  _
              $region113: #{lstm_net_forward.1} parent=97 // pred_fallthru
                _
              // Predicated region
              $region121: #{lstm_net_forward.1} parent=97 // pred_check
                _
              $region122: #{lstm_net_forward.1} parent=97 // pred_check_branch
                %1686 = sbr.rel target = $region124
              $region123: #{lstm_net_forward.1} parent=97 // pred_region
                _
              $region124: #{lstm_net_forward.1} parent=97 // pred_fallthru
                _
            $region98: #{lstm_net_forward.1} parent=93 // pred_fallthru
              _
            // Predicated region
            $region99: #{lstm_net_forward.1} parent=93 // pred_check
              _
            $region100: #{lstm_net_forward.1} parent=93 // pred_check_branch
              %1649 = sbr.rel target = $region102
            $region101: #{lstm_net_forward.1} parent=93 // pred_region
              loop: start=0, step=1, limit=1
              $region103: #{lstm_net_forward.1} parent=101 // loop_pre_header
                _
              $region104: #{lstm_net_forward.1} parent=101 // loop_header
                %s1652 = sphi 0, %s1656
                %p1653 = scmp.ge.s32.totalorder %s1652, 1
                %s1657 = sphi %s1635, %s1635
                %s1658 = sphi %s1643, %s1643
              $region105: #{lstm_net_forward.1} parent=101 // loop_header_branch
                %1655 = sbr.rel (%p1653) target = $region109
              $region106: #{lstm_net_forward.1} parent=101 // loop_body
                %v1659 = vld [vmem:[%s1657] sm:$0xff]
                %1660 = vst [vmem:[%s1658] sm:$0xff] %v1659
                %v1661 = vld [vmem:[%s1657 + $0x8] sm:$0xff]
                %1662 = vst [vmem:[%s1658 + $0x10] sm:$0xff] %v1661
                %v1663 = vld [vmem:[%s1657 + $0x10] sm:$0xff]
                %1664 = vst [vmem:[%s1658 + $0x20] sm:$0xff] %v1663
                %v1665 = vld [vmem:[%s1657 + $0x18] sm:$0xff]
                %1666 = vst [vmem:[%s1658 + $0x30] sm:$0xff] %v1665
              $region107: #{lstm_net_forward.1} parent=101 // loop_footer
                %s1656 = sadd.s32 1, %s1652
              $region108: #{lstm_net_forward.1} parent=101 // loop_footer_branch
                %1651 = sbr.rel target = $region104
              $region109: #{lstm_net_forward.1} parent=101 // loop_exit
                _
            $region102: #{lstm_net_forward.1} parent=93 // pred_fallthru
              _
          $region94: #{lstm_net_forward.1} parent=89 // pred_fallthru
            _
          %1687 = vnop
        $region90: #{lstm_net_forward.1} parent=77 // pred_fallthru
          _
      $region78: #{lstm_net_forward.1} parent=5 // pred_fallthru
        _
      %p1688 = scmp.le.s32.totalorder 2, %s12
      // Predicated region
      $region125: #{lstm_net_forward.1} parent=5 // pred_check
        %p1689 = pneg %p1688
      $region126: #{lstm_net_forward.1} parent=5 // pred_check_branch
        %1691 = sbr.rel (%p1689) target = $region128
      $region127: #{lstm_net_forward.1} parent=5 // pred_region
        %s1692 = ssub.s32 %s12, 2
        // Predicated region
        $region129: #{lstm_net_forward.1} parent=127 // pred_check
          %p1693 = pneg %p188
        $region130: #{lstm_net_forward.1} parent=127 // pred_check_branch
          %1695 = sbr.rel (%p1693) target = $region132
        $region131: #{lstm_net_forward.1} parent=127 // pred_region
          %s1696 = sand.u32 %s173, 1
          %s1697 = sand.u32 %s173, 1
          %s1698 = smul.addr %s1697, 32
          %s1699 = scalar_lea.vmem [#allocation6], %s1698
        $region132: #{lstm_net_forward.1} parent=127 // pred_fallthru
          _
      $region128: #{lstm_net_forward.1} parent=5 // pred_fallthru
        _
    $region6: #{lstm_net_forward.1} parent=1 // loop_footer
      %s16 = sadd.s32 1, %s12
    $region7: #{lstm_net_forward.1} parent=1 // loop_footer_branch
      %11 = sbr.rel target = $region3
    $region8: #{lstm_net_forward.1} parent=1 // loop_exit
      _

</llo_original>
